<compile_context>
chip_gen: v5e
topology: v5e:2x2
jax: 0.10.0
libtpu: 0.0.40
codegen_flags: <defaults>
</compile_context>

<pallas_src>
import jax
import jax.numpy as jnp
from jax.experimental import pallas as pl
from jax.experimental.pallas import tpu as pltpu

HIDDEN = 32      # hidden_neurons (shrunk from the default 80 for a small test)
N_HID1 = 2       # num_hidden_layers1
N_HID2 = 8       # num_hidden_layers2
N_OUT = 5        # number of frozen output layers


# ---------------- fused Pallas kernel ----------------

def _make_wpinn_kernel(compute_dtype):
    """Builds the kernel; compute_dtype controls matmul operand dtype
    (f32 everywhere by default; bf16 is a v6e/v7x-only option)."""

    def kernel(x_ref, y_ref, w1f_ref, whid_ref, bhid_ref,
               w2_in_ref, b2_in_ref, w2_out_ref, b2_out_ref,
               wfus_ref, bfus_ref,
               coeffT_ref, outsT_ref, pf_ref):
        # Layouts (per batch tile of TB points, batch on lanes):
        #   x_ref, y_ref : (1, P*TB)  point-major flat slabs
        #   pf_ref       : (P, TB)    VMEM scratch (never touches HBM)
        #   coeffT_ref   : (F, TB)    outsT_ref : (5, TB)
        P, TB = pf_ref.shape

        def mm(w, v):
            return jnp.dot(w.astype(compute_dtype), v.astype(compute_dtype),
                           preferred_element_type=jnp.float32)

        # ---- stage 1: fused over all P*TB points on the lane axis --------
        w1f = w1f_ref[...]                      # (H, 4)
        w1x = w1f[:, 0:1]                       # (H, 1)
        w1y = w1f[:, 1:2]                       # (H, 1)
        b1 = w1f[:, 2:3]                        # (H, 1)
        w1o = w1f[:, 3:4]                       # (H, 1)  stage-1 output weight

        # first layer: two broadcast VPU FMAs (no degenerate K=2 matmul)
        h = jnp.tanh(w1x * x_ref[...] + w1y * y_ref[...] + b1)   # (H, P*TB)
        for i in range(N_HID1):
            h = jnp.tanh(mm(whid_ref[i], h) + bhid_ref[i])       # (H, P*TB)
        # 1-wide output layer: VPU multiply + cross-sublane (XLU) reduce,
        # not an M=1 MXU op.  (b1_out is folded into b2_in by the wrapper.)
        pf_flat = jnp.sum(w1o * h, axis=0, keepdims=True)        # (1, P*TB)
        # point-major flat -> (P, TB) scratch: P static lane-aligned rows
        for p in range(P):
            pf_ref[pl.ds(p, 1), :] = pf_flat[:, p * TB:(p + 1) * TB]

        # ---- stage 2: P -> H -> (tanh, H)*N_HID2 -> F, + fused heads ------
        h2 = jnp.tanh(mm(w2_in_ref[...], pf_ref[...]) + b2_in_ref[...])
        for i in range(N_HID2):
            h2 = jnp.tanh(mm(whid_ref[N_HID1 + i], h2) + bhid_ref[N_HID1 + i])
        coeffT_ref[...] = mm(w2_out_ref[...], h2) + b2_out_ref[...]   # (F, TB)
        outsT_ref[...] = mm(wfus_ref[...], h2) + bfus_ref[...]        # (5, TB)

    return kernel


# ---------------- parameter init (torch shapes / torch init) ----------------

def _xavier(key, fan_out, fan_in):
    # torch xavier_uniform_ on a (fan_out, fan_in) weight
    bound = (6.0 / (fan_in + fan_out)) ** 0.5
    return jax.random.uniform(key, (fan_out, fan_in), jnp.float32, -bound, bound)


def init_params(key, input_size, family_size, hidden=HIDDEN):
    keys = jax.random.split(key, 4 + N_HID1 + N_HID2)
    k = iter(keys)
    p = {}
    # first_stage: Linear(2,H), N_HID1 x Linear(H,H), Linear(H,1); biases = 0
    p['w1_in'] = _xavier(next(k), hidden, 2)                   # (H, 2)
    p['b1_in'] = jnp.zeros((hidden, 1), jnp.float32)
    p['w1_hid'] = jnp.stack([_xavier(next(k), hidden, hidden)
                             for _ in range(N_HID1)])          # (N1, H, H)
    p['b1_hid'] = jnp.zeros((N_HID1, hidden, 1), jnp.float32)
    p['w1_out'] = _xavier(next(k), 1, hidden)                  # (1, H)
    p['b1_out'] = jnp.zeros((1, 1), jnp.float32)
    # second_stage: Linear(input_size,H), N_HID2 x Linear(H,H), Linear(H,F)
    p['w2_in'] = _xavier(next(k), hidden, input_size)          # (H, P)
    p['b2_in'] = jnp.zeros((hidden, 1), jnp.float32)
    p['w2_hid'] = jnp.stack([_xavier(next(k), hidden, hidden)
                             for _ in range(N_HID2)])          # (N2, H, H)
    p['b2_hid'] = jnp.zeros((N_HID2, hidden, 1), jnp.float32)
    p['w2_out'] = _xavier(next(k), family_size, hidden)        # (F, H)
    p['b2_out'] = jnp.zeros((family_size, 1), jnp.float32)
    # output_layers: layer 0 bias = 0.5 (trainable), others 0.0
    p['b_fam'] = jnp.array([[0.5]] + [[0.0]] * (N_OUT - 1), jnp.float32)
    return p


# ---------------- forward wrapper ----------------

def _round_up(a, m):
    return (a + m - 1) // m * m


def wpinn_forward(x, y, W, params, *, compute_dtype=jnp.float32):
    B, P = x.shape
    F = params['w2_out'].shape[0]

    # Batch tiling: lane-aligned (multiple of 128); for B > 128 split into
    # >= 2 tiles so dimension_semantics=("parallel",) can use both v7x TCs.
    TB = min(1024, _round_up(max(pl.cdiv(B, 2), 1), 128))
    B_pad = _round_up(B, TB)
    n_tiles = B_pad // TB

    # ---- layout plumbing (XLA side, done once on tiny data) ---------------
    def to_tiles(a):        # (B, P) -> (n_tiles, P*TB), point-major per tile
        a = jnp.pad(a.astype(jnp.float32), ((0, B_pad - B), (0, 0)))
        a = a.T.reshape(P, n_tiles, TB).transpose(1, 0, 2)
        return a.reshape(n_tiles, P * TB)

    x_tiles = to_tiles(x)
    y_tiles = to_tiles(y)

    # ---- parameter packing / algebraic folds (all exact rewrites) ---------
    w1_in = params['w1_in']                                    # (H, 2)
    w1f = jnp.concatenate([w1_in[:, 0:1], w1_in[:, 1:2],
                           params['b1_in'], params['w1_out'].T], axis=1)  # (H,4)
    whid = jnp.concatenate([params['w1_hid'], params['w2_hid']], axis=0)  # (N1+N2,H,H)
    bhid = jnp.concatenate([params['b1_hid'], params['b2_hid']], axis=0)  # (N1+N2,H,1)
    # fold the stage-1 output bias into the stage-2 input bias
    b2_in_eff = params['b2_in'] + params['b1_out'][0, 0] * jnp.sum(
        params['w2_in'], axis=1, keepdims=True)                # (H, 1)
    # fold the 5 frozen heads onto the stage-2 output weights
    w_fam = W.reshape(N_OUT, F)                                # (5, F)
    w_fused = w_fam @ params['w2_out']                         # (5, H)
    b_fused = w_fam @ params['b2_out'] + params['b_fam']       # (5, 1)

    weight_args = [w1f, whid, bhid, params['w2_in'], b2_in_eff,
                   params['w2_out'], params['b2_out'], w_fused, b_fused]
    c2 = lambda i: (0, 0)
    c3 = lambda i: (0, 0, 0)
    weight_specs = [pl.BlockSpec(a.shape, c3 if a.ndim == 3 else c2)
                    for a in weight_args]

    coeffT, outsT = pl.pallas_call(
        _make_wpinn_kernel(compute_dtype),
        out_shape=(jax.ShapeDtypeStruct((F, B_pad), jnp.float32),
                   jax.ShapeDtypeStruct((N_OUT, B_pad), jnp.float32)),
        grid=(n_tiles,),
        in_specs=[pl.BlockSpec((1, P * TB), lambda i: (i, 0)),
                  pl.BlockSpec((1, P * TB), lambda i: (i, 0))] + weight_specs,
        out_specs=(pl.BlockSpec((F, TB), lambda i: (0, i)),
                   pl.BlockSpec((N_OUT, TB), lambda i: (0, i))),
        scratch_shapes=[pltpu.VMEM((P, TB), jnp.float32)],   # pf stays in VMEM
        compiler_params=pltpu.CompilerParams(
            dimension_semantics=("parallel",),
            # TODO(synk): re-derive against v7x's 64 MiB VMEM if HIDDEN/P/TB
            # are scaled to the production config (HIDDEN=80, larger tiles).
            vmem_limit_bytes=32 * 1024 * 1024),
    )(x_tiles, y_tiles, *weight_args)

    coefficients = coeffT[:, :B].T             # (B, F)
    outs = outsT[:, :B].T                      # (B, 5)
    bias = params['b_fam'][0, 0]               # output_layers[0].bias
    outputs = [outs[:, i:i + 1] for i in range(N_OUT)]   # torch-style list
    return coefficients, bias, outputs


# ---------------- pure-JAX reference (for correctness check) ----------------

def wpinn_reference(x, y, W, params):
    xy = jnp.stack([x, y], axis=-1)                              # (B, P, 2)
    h = jnp.tanh(xy @ params['w1_in'].T + params['b1_in'][:, 0])
    for i in range(N_HID1):
        h = jnp.tanh(h @ params['w1_hid'][i].T + params['b1_hid'][i][:, 0])
    pf = (h @ params['w1_out'].T + params['b1_out'][:, 0])[..., 0]
    h2 = jnp.tanh(pf @ params['w2_in'].T + params['b2_in'][:, 0])
    for i in range(N_HID2):
        h2 = jnp.tanh(h2 @ params['w2_hid'][i].T + params['b2_hid'][i][:, 0])
    coeff = h2 @ params['w2_out'].T + params['b2_out'][:, 0]
    w_fam = W.reshape(N_OUT, -1)
    outs = coeff @ w_fam.T + params['b_fam'][:, 0]
    bias = params['b_fam'][0, 0]
    return coeff, bias, [outs[:, i:i + 1] for i in range(N_OUT)]


if __name__ == "__main__":
    def run_case(B, P, F, key):
        k_par, kx, ky, kw = jax.random.split(key, 4)
        params = init_params(k_par, input_size=P, family_size=F)
        x = jax.random.uniform(kx, (B, P), jnp.float32)
        y = jax.random.uniform(ky, (B, P), jnp.float32)
        W = jax.random.normal(kw, (N_OUT, 1, F), jnp.float32)   # per-layer (1,F)

        coeff, bias, outputs = jax.jit(wpinn_forward)(x, y, W, params)
        jax.block_until_ready((coeff, bias, outputs))

        coeff_ref, bias_ref, outputs_ref = wpinn_reference(x, y, W, params)
        assert coeff.shape == (B, F)
        assert len(outputs) == N_OUT and all(o.shape == (B, 1) for o in outputs)
        assert jnp.allclose(coeff, coeff_ref, atol=1e-3, rtol=1e-2)
        assert all(jnp.allclose(o, r, atol=1e-3, rtol=1e-2)
                   for o, r in zip(outputs, outputs_ref))
        assert jnp.allclose(bias, bias_ref)

    # single-tile small batch, and a multi-tile batch with B % TB != 0
    run_case(B=2, P=16, F=8, key=jax.random.PRNGKey(0))
    run_case(B=300, P=16, F=8, key=jax.random.PRNGKey(1))
    print("KERNEL_OK")
</pallas_src>

<mosaic_0001>
module attributes {stable_mosaic.version = 11 : i64} {
  func.func @kernel(%arg0: i32, %arg1: memref<1x2048xf32, #tpu.memory_space<vmem>>, %arg2: memref<1x2048xf32, #tpu.memory_space<vmem>>, %arg3: memref<32x4xf32, #tpu.memory_space<vmem>>, %arg4: memref<10x32x32xf32, #tpu.memory_space<vmem>>, %arg5: memref<10x32x1xf32, #tpu.memory_space<vmem>>, %arg6: memref<32x16xf32, #tpu.memory_space<vmem>>, %arg7: memref<32x1xf32, #tpu.memory_space<vmem>>, %arg8: memref<8x32xf32, #tpu.memory_space<vmem>>, %arg9: memref<8x1xf32, #tpu.memory_space<vmem>>, %arg10: memref<5x32xf32, #tpu.memory_space<vmem>>, %arg11: memref<5x1xf32, #tpu.memory_space<vmem>>, %arg12: memref<8x128xf32, #tpu.memory_space<vmem>>, %arg13: memref<5x128xf32, #tpu.memory_space<vmem>>, %arg14: memref<16x128xf32, #tpu.memory_space<vmem>>) attributes {dimension_semantics = [#tpu.dimension_semantics<parallel>], iteration_bounds = array<i64: 1>, scalar_prefetch = 0 : i64, scratch_operands = 1 : i64, tpu.core_type = #tpu.core_type<tc>, window_params = [{transform_indices = @transform_0, window_bounds = array<i64: 1, 2048>}, {transform_indices = @transform_1, window_bounds = array<i64: 1, 2048>}, {pipeline_mode = #tpu.pipeline_mode<synchronous>, transform_indices = @transform_2, window_bounds = array<i64: 32, 4>}, {pipeline_mode = #tpu.pipeline_mode<synchronous>, transform_indices = @transform_3, window_bounds = array<i64: 10, 32, 32>}, {pipeline_mode = #tpu.pipeline_mode<synchronous>, transform_indices = @transform_4, window_bounds = array<i64: 10, 32, 1>}, {pipeline_mode = #tpu.pipeline_mode<synchronous>, transform_indices = @transform_5, window_bounds = array<i64: 32, 16>}, {pipeline_mode = #tpu.pipeline_mode<synchronous>, transform_indices = @transform_6, window_bounds = array<i64: 32, 1>}, {pipeline_mode = #tpu.pipeline_mode<synchronous>, transform_indices = @transform_7, window_bounds = array<i64: 8, 32>}, {pipeline_mode = #tpu.pipeline_mode<synchronous>, transform_indices = @transform_8, window_bounds = array<i64: 8, 1>}, {pipeline_mode = #tpu.pipeline_mode<synchronous>, transform_indices = @transform_9, window_bounds = array<i64: 5, 32>}, {pipeline_mode = #tpu.pipeline_mode<synchronous>, transform_indices = @transform_10, window_bounds = array<i64: 5, 1>}, {transform_indices = @transform_11, window_bounds = array<i64: 8, 128>}, {transform_indices = @transform_12, window_bounds = array<i64: 5, 128>}]} {
    %c0 = arith.constant 0 : index
    %c0_0 = arith.constant 0 : index
    %0 = vector.load %arg3[%c0, %c0_0] : memref<32x4xf32, #tpu.memory_space<vmem>>, vector<32x4xf32>
    %1 = vector.extract_strided_slice %0 {offsets = [0, 0], sizes = [32, 1], strides = [1, 1]} : vector<32x4xf32> to vector<32x1xf32>
    %2 = vector.extract_strided_slice %0 {offsets = [0, 1], sizes = [32, 1], strides = [1, 1]} : vector<32x4xf32> to vector<32x1xf32>
    %3 = vector.extract_strided_slice %0 {offsets = [0, 2], sizes = [32, 1], strides = [1, 1]} : vector<32x4xf32> to vector<32x1xf32>
    %4 = vector.extract_strided_slice %0 {offsets = [0, 3], sizes = [32, 1], strides = [1, 1]} : vector<32x4xf32> to vector<32x1xf32>
    %c0_1 = arith.constant 0 : index
    %c0_2 = arith.constant 0 : index
    %5 = vector.load %arg1[%c0_1, %c0_2] : memref<1x2048xf32, #tpu.memory_space<vmem>>, vector<1x2048xf32>
    %6 = vector.broadcast %1 : vector<32x1xf32> to vector<32x2048xf32>
    %7 = vector.broadcast %5 : vector<1x2048xf32> to vector<32x2048xf32>
    %8 = arith.mulf %6, %7 : vector<32x2048xf32>
    %c0_3 = arith.constant 0 : index
    %c0_4 = arith.constant 0 : index
    %9 = vector.load %arg2[%c0_3, %c0_4] : memref<1x2048xf32, #tpu.memory_space<vmem>>, vector<1x2048xf32>
    %10 = vector.broadcast %2 : vector<32x1xf32> to vector<32x2048xf32>
    %11 = vector.broadcast %9 : vector<1x2048xf32> to vector<32x2048xf32>
    %12 = arith.mulf %10, %11 : vector<32x2048xf32>
    %13 = arith.addf %8, %12 : vector<32x2048xf32>
    %14 = vector.broadcast %3 : vector<32x1xf32> to vector<32x2048xf32>
    %15 = arith.addf %13, %14 : vector<32x2048xf32>
    %16 = math.tanh %15 : vector<32x2048xf32>
    %c0_5 = arith.constant 0 : index
    %c0_6 = arith.constant 0 : index
    %c0_7 = arith.constant 0 : index
    %17 = vector.load %arg4[%c0_5, %c0_6, %c0_7] : memref<10x32x32xf32, #tpu.memory_space<vmem>>, vector<1x32x32xf32>
    %18 = vector.shape_cast %17 : vector<1x32x32xf32> to vector<32x32xf32>
    %cst = arith.constant dense<0.000000e+00> : vector<32x2048xf32>
    %19 = tpu.matmul %18, %16, %cst {dimension_numbers = #tpu.dot_dimension_numbers<[1], [0], [0], [1], [0, 0, 1, 1], [], []>} : vector<32x32xf32>, vector<32x2048xf32>, vector<32x2048xf32> -> vector<32x2048xf32>
    %c0_8 = arith.constant 0 : index
    %c0_9 = arith.constant 0 : index
    %c0_10 = arith.constant 0 : index
    %20 = vector.load %arg5[%c0_8, %c0_9, %c0_10] : memref<10x32x1xf32, #tpu.memory_space<vmem>>, vector<1x32x1xf32>
    %21 = vector.shape_cast %20 : vector<1x32x1xf32> to vector<32x1xf32>
    %22 = vector.broadcast %21 : vector<32x1xf32> to vector<32x2048xf32>
    %23 = arith.addf %19, %22 : vector<32x2048xf32>
    %24 = math.tanh %23 : vector<32x2048xf32>
    %c1 = arith.constant 1 : index
    %c0_11 = arith.constant 0 : index
    %c0_12 = arith.constant 0 : index
    %25 = vector.load %arg4[%c1, %c0_11, %c0_12] : memref<10x32x32xf32, #tpu.memory_space<vmem>>, vector<1x32x32xf32>
    %26 = vector.shape_cast %25 : vector<1x32x32xf32> to vector<32x32xf32>
    %cst_13 = arith.constant dense<0.000000e+00> : vector<32x2048xf32>
    %27 = tpu.matmul %26, %24, %cst_13 {dimension_numbers = #tpu.dot_dimension_numbers<[1], [0], [0], [1], [0, 0, 1, 1], [], []>} : vector<32x32xf32>, vector<32x2048xf32>, vector<32x2048xf32> -> vector<32x2048xf32>
    %c1_14 = arith.constant 1 : index
    %c0_15 = arith.constant 0 : index
    %c0_16 = arith.constant 0 : index
    %28 = vector.load %arg5[%c1_14, %c0_15, %c0_16] : memref<10x32x1xf32, #tpu.memory_space<vmem>>, vector<1x32x1xf32>
    %29 = vector.shape_cast %28 : vector<1x32x1xf32> to vector<32x1xf32>
    %30 = vector.broadcast %29 : vector<32x1xf32> to vector<32x2048xf32>
    %31 = arith.addf %27, %30 : vector<32x2048xf32>
    %32 = math.tanh %31 : vector<32x2048xf32>
    %33 = vector.broadcast %4 : vector<32x1xf32> to vector<32x2048xf32>
    %34 = arith.mulf %33, %32 : vector<32x2048xf32>
    %cst_17 = arith.constant dense<0.000000e+00> : vector<2048xf32>
    %35 = vector.multi_reduction <add>, %34, %cst_17 [0] : vector<32x2048xf32> to vector<2048xf32>
    %36 = vector.shape_cast %35 : vector<2048xf32> to vector<1x2048xf32>
    %37 = vector.extract_strided_slice %36 {offsets = [0, 0], sizes = [1, 128], strides = [1, 1]} : vector<1x2048xf32> to vector<1x128xf32>
    %c0_18 = arith.constant 0 : index
    %c0_19 = arith.constant 0 : index
    %38 = vector.load %arg14[%c0_18, %c0_19] : memref<16x128xf32, #tpu.memory_space<vmem>>, vector<1x128xf32>
    tpu.vector_store %arg14[%c0_18, %c0_19], %37 {strides = array<i32>} : memref<16x128xf32, #tpu.memory_space<vmem>>, vector<1x128xf32>,
    %39 = vector.extract_strided_slice %36 {offsets = [0, 128], sizes = [1, 128], strides = [1, 1]} : vector<1x2048xf32> to vector<1x128xf32>
    %c1_20 = arith.constant 1 : index
    %c0_21 = arith.constant 0 : index
    %40 = vector.load %arg14[%c1_20, %c0_21] : memref<16x128xf32, #tpu.memory_space<vmem>>, vector<1x128xf32>
    tpu.vector_store %arg14[%c1_20, %c0_21], %39 {strides = array<i32>} : memref<16x128xf32, #tpu.memory_space<vmem>>, vector<1x128xf32>,
    %41 = vector.extract_strided_slice %36 {offsets = [0, 256], sizes = [1, 128], strides = [1, 1]} : vector<1x2048xf32> to vector<1x128xf32>
    %c2 = arith.constant 2 : index
    %c0_22 = arith.constant 0 : index
    %42 = vector.load %arg14[%c2, %c0_22] : memref<16x128xf32, #tpu.memory_space<vmem>>, vector<1x128xf32>
    tpu.vector_store %arg14[%c2, %c0_22], %41 {strides = array<i32>} : memref<16x128xf32, #tpu.memory_space<vmem>>, vector<1x128xf32>,
    %43 = vector.extract_strided_slice %36 {offsets = [0, 384], sizes = [1, 128], strides = [1, 1]} : vector<1x2048xf32> to vector<1x128xf32>
    %c3 = arith.constant 3 : index
    %c0_23 = arith.constant 0 : index
    %44 = vector.load %arg14[%c3, %c0_23] : memref<16x128xf32, #tpu.memory_space<vmem>>, vector<1x128xf32>
    tpu.vector_store %arg14[%c3, %c0_23], %43 {strides = array<i32>} : memref<16x128xf32, #tpu.memory_space<vmem>>, vector<1x128xf32>,
    %45 = vector.extract_strided_slice %36 {offsets = [0, 512], sizes = [1, 128], strides = [1, 1]} : vector<1x2048xf32> to vector<1x128xf32>
    %c4 = arith.constant 4 : index
    %c0_24 = arith.constant 0 : index
    %46 = vector.load %arg14[%c4, %c0_24] : memref<16x128xf32, #tpu.memory_space<vmem>>, vector<1x128xf32>
    tpu.vector_store %arg14[%c4, %c0_24], %45 {strides = array<i32>} : memref<16x128xf32, #tpu.memory_space<vmem>>, vector<1x128xf32>,
    %47 = vector.extract_strided_slice %36 {offsets = [0, 640], sizes = [1, 128], strides = [1, 1]} : vector<1x2048xf32> to vector<1x128xf32>
    %c5 = arith.constant 5 : index
    %c0_25 = arith.constant 0 : index
    %48 = vector.load %arg14[%c5, %c0_25] : memref<16x128xf32, #tpu.memory_space<vmem>>, vector<1x128xf32>
    tpu.vector_store %arg14[%c5, %c0_25], %47 {strides = array<i32>} : memref<16x128xf32, #tpu.memory_space<vmem>>, vector<1x128xf32>,
    %49 = vector.extract_strided_slice %36 {offsets = [0, 768], sizes = [1, 128], strides = [1, 1]} : vector<1x2048xf32> to vector<1x128xf32>
    %c6 = arith.constant 6 : index
    %c0_26 = arith.constant 0 : index
    %50 = vector.load %arg14[%c6, %c0_26] : memref<16x128xf32, #tpu.memory_space<vmem>>, vector<1x128xf32>
    tpu.vector_store %arg14[%c6, %c0_26], %49 {strides = array<i32>} : memref<16x128xf32, #tpu.memory_space<vmem>>, vector<1x128xf32>,
    %51 = vector.extract_strided_slice %36 {offsets = [0, 896], sizes = [1, 128], strides = [1, 1]} : vector<1x2048xf32> to vector<1x128xf32>
    %c7 = arith.constant 7 : index
    %c0_27 = arith.constant 0 : index
    %52 = vector.load %arg14[%c7, %c0_27] : memref<16x128xf32, #tpu.memory_space<vmem>>, vector<1x128xf32>
    tpu.vector_store %arg14[%c7, %c0_27], %51 {strides = array<i32>} : memref<16x128xf32, #tpu.memory_space<vmem>>, vector<1x128xf32>,
    %53 = vector.extract_strided_slice %36 {offsets = [0, 1024], sizes = [1, 128], strides = [1, 1]} : vector<1x2048xf32> to vector<1x128xf32>
    %c8 = arith.constant 8 : index
    %c0_28 = arith.constant 0 : index
    %54 = vector.load %arg14[%c8, %c0_28] : memref<16x128xf32, #tpu.memory_space<vmem>>, vector<1x128xf32>
    tpu.vector_store %arg14[%c8, %c0_28], %53 {strides = array<i32>} : memref<16x128xf32, #tpu.memory_space<vmem>>, vector<1x128xf32>,
    %55 = vector.extract_strided_slice %36 {offsets = [0, 1152], sizes = [1, 128], strides = [1, 1]} : vector<1x2048xf32> to vector<1x128xf32>
    %c9 = arith.constant 9 : index
    %c0_29 = arith.constant 0 : index
    %56 = vector.load %arg14[%c9, %c0_29] : memref<16x128xf32, #tpu.memory_space<vmem>>, vector<1x128xf32>
    tpu.vector_store %arg14[%c9, %c0_29], %55 {strides = array<i32>} : memref<16x128xf32, #tpu.memory_space<vmem>>, vector<1x128xf32>,
    %57 = vector.extract_strided_slice %36 {offsets = [0, 1280], sizes = [1, 128], strides = [1, 1]} : vector<1x2048xf32> to vector<1x128xf32>
    %c10 = arith.constant 10 : index
    %c0_30 = arith.constant 0 : index
    %58 = vector.load %arg14[%c10, %c0_30] : memref<16x128xf32, #tpu.memory_space<vmem>>, vector<1x128xf32>
    tpu.vector_store %arg14[%c10, %c0_30], %57 {strides = array<i32>} : memref<16x128xf32, #tpu.memory_space<vmem>>, vector<1x128xf32>,
    %59 = vector.extract_strided_slice %36 {offsets = [0, 1408], sizes = [1, 128], strides = [1, 1]} : vector<1x2048xf32> to vector<1x128xf32>
    %c11 = arith.constant 11 : index
    %c0_31 = arith.constant 0 : index
    %60 = vector.load %arg14[%c11, %c0_31] : memref<16x128xf32, #tpu.memory_space<vmem>>, vector<1x128xf32>
    tpu.vector_store %arg14[%c11, %c0_31], %59 {strides = array<i32>} : memref<16x128xf32, #tpu.memory_space<vmem>>, vector<1x128xf32>,
    %61 = vector.extract_strided_slice %36 {offsets = [0, 1536], sizes = [1, 128], strides = [1, 1]} : vector<1x2048xf32> to vector<1x128xf32>
    %c12 = arith.constant 12 : index
    %c0_32 = arith.constant 0 : index
    %62 = vector.load %arg14[%c12, %c0_32] : memref<16x128xf32, #tpu.memory_space<vmem>>, vector<1x128xf32>
    tpu.vector_store %arg14[%c12, %c0_32], %61 {strides = array<i32>} : memref<16x128xf32, #tpu.memory_space<vmem>>, vector<1x128xf32>,
    %63 = vector.extract_strided_slice %36 {offsets = [0, 1664], sizes = [1, 128], strides = [1, 1]} : vector<1x2048xf32> to vector<1x128xf32>
    %c13 = arith.constant 13 : index
    %c0_33 = arith.constant 0 : index
    %64 = vector.load %arg14[%c13, %c0_33] : memref<16x128xf32, #tpu.memory_space<vmem>>, vector<1x128xf32>
    tpu.vector_store %arg14[%c13, %c0_33], %63 {strides = array<i32>} : memref<16x128xf32, #tpu.memory_space<vmem>>, vector<1x128xf32>,
    %65 = vector.extract_strided_slice %36 {offsets = [0, 1792], sizes = [1, 128], strides = [1, 1]} : vector<1x2048xf32> to vector<1x128xf32>
    %c14 = arith.constant 14 : index
    %c0_34 = arith.constant 0 : index
    %66 = vector.load %arg14[%c14, %c0_34] : memref<16x128xf32, #tpu.memory_space<vmem>>, vector<1x128xf32>
    tpu.vector_store %arg14[%c14, %c0_34], %65 {strides = array<i32>} : memref<16x128xf32, #tpu.memory_space<vmem>>, vector<1x128xf32>,
    %67 = vector.extract_strided_slice %36 {offsets = [0, 1920], sizes = [1, 128], strides = [1, 1]} : vector<1x2048xf32> to vector<1x128xf32>
    %c15 = arith.constant 15 : index
    %c0_35 = arith.constant 0 : index
    %68 = vector.load %arg14[%c15, %c0_35] : memref<16x128xf32, #tpu.memory_space<vmem>>, vector<1x128xf32>
    tpu.vector_store %arg14[%c15, %c0_35], %67 {strides = array<i32>} : memref<16x128xf32, #tpu.memory_space<vmem>>, vector<1x128xf32>,
    %c0_36 = arith.constant 0 : index
    %c0_37 = arith.constant 0 : index
    %69 = vector.load %arg6[%c0_36, %c0_37] : memref<32x16xf32, #tpu.memory_space<vmem>>, vector<32x16xf32>
    %c0_38 = arith.constant 0 : index
    %c0_39 = arith.constant 0 : index
    %70 = vector.load %arg14[%c0_38, %c0_39] : memref<16x128xf32, #tpu.memory_space<vmem>>, vector<16x128xf32>
    %cst_40 = arith.constant dense<0.000000e+00> : vector<32x128xf32>
    %71 = tpu.matmul %69, %70, %cst_40 {dimension_numbers = #tpu.dot_dimension_numbers<[1], [0], [0], [1], [0, 0, 1, 1], [], []>} : vector<32x16xf32>, vector<16x128xf32>, vector<32x128xf32> -> vector<32x128xf32>
    %c0_41 = arith.constant 0 : index
    %c0_42 = arith.constant 0 : index
    %72 = vector.load %arg7[%c0_41, %c0_42] : memref<32x1xf32, #tpu.memory_space<vmem>>, vector<32x1xf32>
    %73 = vector.broadcast %72 : vector<32x1xf32> to vector<32x128xf32>
    %74 = arith.addf %71, %73 : vector<32x128xf32>
    %75 = math.tanh %74 : vector<32x128xf32>
    %c2_43 = arith.constant 2 : index
    %c0_44 = arith.constant 0 : index
    %c0_45 = arith.constant 0 : index
    %76 = vector.load %arg4[%c2_43, %c0_44, %c0_45] : memref<10x32x32xf32, #tpu.memory_space<vmem>>, vector<1x32x32xf32>
    %77 = vector.shape_cast %76 : vector<1x32x32xf32> to vector<32x32xf32>
    %cst_46 = arith.constant dense<0.000000e+00> : vector<32x128xf32>
    %78 = tpu.matmul %77, %75, %cst_46 {dimension_numbers = #tpu.dot_dimension_numbers<[1], [0], [0], [1], [0, 0, 1, 1], [], []>} : vector<32x32xf32>, vector<32x128xf32>, vector<32x128xf32> -> vector<32x128xf32>
    %c2_47 = arith.constant 2 : index
    %c0_48 = arith.constant 0 : index
    %c0_49 = arith.constant 0 : index
    %79 = vector.load %arg5[%c2_47, %c0_48, %c0_49] : memref<10x32x1xf32, #tpu.memory_space<vmem>>, vector<1x32x1xf32>
    %80 = vector.shape_cast %79 : vector<1x32x1xf32> to vector<32x1xf32>
    %81 = vector.broadcast %80 : vector<32x1xf32> to vector<32x128xf32>
    %82 = arith.addf %78, %81 : vector<32x128xf32>
    %83 = math.tanh %82 : vector<32x128xf32>
    %c3_50 = arith.constant 3 : index
    %c0_51 = arith.constant 0 : index
    %c0_52 = arith.constant 0 : index
    %84 = vector.load %arg4[%c3_50, %c0_51, %c0_52] : memref<10x32x32xf32, #tpu.memory_space<vmem>>, vector<1x32x32xf32>
    %85 = vector.shape_cast %84 : vector<1x32x32xf32> to vector<32x32xf32>
    %cst_53 = arith.constant dense<0.000000e+00> : vector<32x128xf32>
    %86 = tpu.matmul %85, %83, %cst_53 {dimension_numbers = #tpu.dot_dimension_numbers<[1], [0], [0], [1], [0, 0, 1, 1], [], []>} : vector<32x32xf32>, vector<32x128xf32>, vector<32x128xf32> -> vector<32x128xf32>
    %c3_54 = arith.constant 3 : index
    %c0_55 = arith.constant 0 : index
    %c0_56 = arith.constant 0 : index
    %87 = vector.load %arg5[%c3_54, %c0_55, %c0_56] : memref<10x32x1xf32, #tpu.memory_space<vmem>>, vector<1x32x1xf32>
    %88 = vector.shape_cast %87 : vector<1x32x1xf32> to vector<32x1xf32>
    %89 = vector.broadcast %88 : vector<32x1xf32> to vector<32x128xf32>
    %90 = arith.addf %86, %89 : vector<32x128xf32>
    %91 = math.tanh %90 : vector<32x128xf32>
    %c4_57 = arith.constant 4 : index
    %c0_58 = arith.constant 0 : index
    %c0_59 = arith.constant 0 : index
    %92 = vector.load %arg4[%c4_57, %c0_58, %c0_59] : memref<10x32x32xf32, #tpu.memory_space<vmem>>, vector<1x32x32xf32>
    %93 = vector.shape_cast %92 : vector<1x32x32xf32> to vector<32x32xf32>
    %cst_60 = arith.constant dense<0.000000e+00> : vector<32x128xf32>
    %94 = tpu.matmul %93, %91, %cst_60 {dimension_numbers = #tpu.dot_dimension_numbers<[1], [0], [0], [1], [0, 0, 1, 1], [], []>} : vector<32x32xf32>, vector<32x128xf32>, vector<32x128xf32> -> vector<32x128xf32>
    %c4_61 = arith.constant 4 : index
    %c0_62 = arith.constant 0 : index
    %c0_63 = arith.constant 0 : index
    %95 = vector.load %arg5[%c4_61, %c0_62, %c0_63] : memref<10x32x1xf32, #tpu.memory_space<vmem>>, vector<1x32x1xf32>
    %96 = vector.shape_cast %95 : vector<1x32x1xf32> to vector<32x1xf32>
    %97 = vector.broadcast %96 : vector<32x1xf32> to vector<32x128xf32>
    %98 = arith.addf %94, %97 : vector<32x128xf32>
    %99 = math.tanh %98 : vector<32x128xf32>
    %c5_64 = arith.constant 5 : index
    %c0_65 = arith.constant 0 : index
    %c0_66 = arith.constant 0 : index
    %100 = vector.load %arg4[%c5_64, %c0_65, %c0_66] : memref<10x32x32xf32, #tpu.memory_space<vmem>>, vector<1x32x32xf32>
    %101 = vector.shape_cast %100 : vector<1x32x32xf32> to vector<32x32xf32>
    %cst_67 = arith.constant dense<0.000000e+00> : vector<32x128xf32>
    %102 = tpu.matmul %101, %99, %cst_67 {dimension_numbers = #tpu.dot_dimension_numbers<[1], [0], [0], [1], [0, 0, 1, 1], [], []>} : vector<32x32xf32>, vector<32x128xf32>, vector<32x128xf32> -> vector<32x128xf32>
    %c5_68 = arith.constant 5 : index
    %c0_69 = arith.constant 0 : index
    %c0_70 = arith.constant 0 : index
    %103 = vector.load %arg5[%c5_68, %c0_69, %c0_70] : memref<10x32x1xf32, #tpu.memory_space<vmem>>, vector<1x32x1xf32>
    %104 = vector.shape_cast %103 : vector<1x32x1xf32> to vector<32x1xf32>
    %105 = vector.broadcast %104 : vector<32x1xf32> to vector<32x128xf32>
    %106 = arith.addf %102, %105 : vector<32x128xf32>
    %107 = math.tanh %106 : vector<32x128xf32>
    %c6_71 = arith.constant 6 : index
    %c0_72 = arith.constant 0 : index
    %c0_73 = arith.constant 0 : index
    %108 = vector.load %arg4[%c6_71, %c0_72, %c0_73] : memref<10x32x32xf32, #tpu.memory_space<vmem>>, vector<1x32x32xf32>
    %109 = vector.shape_cast %108 : vector<1x32x32xf32> to vector<32x32xf32>
    %cst_74 = arith.constant dense<0.000000e+00> : vector<32x128xf32>
    %110 = tpu.matmul %109, %107, %cst_74 {dimension_numbers = #tpu.dot_dimension_numbers<[1], [0], [0], [1], [0, 0, 1, 1], [], []>} : vector<32x32xf32>, vector<32x128xf32>, vector<32x128xf32> -> vector<32x128xf32>
    %c6_75 = arith.constant 6 : index
    %c0_76 = arith.constant 0 : index
    %c0_77 = arith.constant 0 : index
    %111 = vector.load %arg5[%c6_75, %c0_76, %c0_77] : memref<10x32x1xf32, #tpu.memory_space<vmem>>, vector<1x32x1xf32>
    %112 = vector.shape_cast %111 : vector<1x32x1xf32> to vector<32x1xf32>
    %113 = vector.broadcast %112 : vector<32x1xf32> to vector<32x128xf32>
    %114 = arith.addf %110, %113 : vector<32x128xf32>
    %115 = math.tanh %114 : vector<32x128xf32>
    %c7_78 = arith.constant 7 : index
    %c0_79 = arith.constant 0 : index
    %c0_80 = arith.constant 0 : index
    %116 = vector.load %arg4[%c7_78, %c0_79, %c0_80] : memref<10x32x32xf32, #tpu.memory_space<vmem>>, vector<1x32x32xf32>
    %117 = vector.shape_cast %116 : vector<1x32x32xf32> to vector<32x32xf32>
    %cst_81 = arith.constant dense<0.000000e+00> : vector<32x128xf32>
    %118 = tpu.matmul %117, %115, %cst_81 {dimension_numbers = #tpu.dot_dimension_numbers<[1], [0], [0], [1], [0, 0, 1, 1], [], []>} : vector<32x32xf32>, vector<32x128xf32>, vector<32x128xf32> -> vector<32x128xf32>
    %c7_82 = arith.constant 7 : index
    %c0_83 = arith.constant 0 : index
    %c0_84 = arith.constant 0 : index
    %119 = vector.load %arg5[%c7_82, %c0_83, %c0_84] : memref<10x32x1xf32, #tpu.memory_space<vmem>>, vector<1x32x1xf32>
    %120 = vector.shape_cast %119 : vector<1x32x1xf32> to vector<32x1xf32>
    %121 = vector.broadcast %120 : vector<32x1xf32> to vector<32x128xf32>
    %122 = arith.addf %118, %121 : vector<32x128xf32>
    %123 = math.tanh %122 : vector<32x128xf32>
    %c8_85 = arith.constant 8 : index
    %c0_86 = arith.constant 0 : index
    %c0_87 = arith.constant 0 : index
    %124 = vector.load %arg4[%c8_85, %c0_86, %c0_87] : memref<10x32x32xf32, #tpu.memory_space<vmem>>, vector<1x32x32xf32>
    %125 = vector.shape_cast %124 : vector<1x32x32xf32> to vector<32x32xf32>
    %cst_88 = arith.constant dense<0.000000e+00> : vector<32x128xf32>
    %126 = tpu.matmul %125, %123, %cst_88 {dimension_numbers = #tpu.dot_dimension_numbers<[1], [0], [0], [1], [0, 0, 1, 1], [], []>} : vector<32x32xf32>, vector<32x128xf32>, vector<32x128xf32> -> vector<32x128xf32>
    %c8_89 = arith.constant 8 : index
    %c0_90 = arith.constant 0 : index
    %c0_91 = arith.constant 0 : index
    %127 = vector.load %arg5[%c8_89, %c0_90, %c0_91] : memref<10x32x1xf32, #tpu.memory_space<vmem>>, vector<1x32x1xf32>
    %128 = vector.shape_cast %127 : vector<1x32x1xf32> to vector<32x1xf32>
    %129 = vector.broadcast %128 : vector<32x1xf32> to vector<32x128xf32>
    %130 = arith.addf %126, %129 : vector<32x128xf32>
    %131 = math.tanh %130 : vector<32x128xf32>
    %c9_92 = arith.constant 9 : index
    %c0_93 = arith.constant 0 : index
    %c0_94 = arith.constant 0 : index
    %132 = vector.load %arg4[%c9_92, %c0_93, %c0_94] : memref<10x32x32xf32, #tpu.memory_space<vmem>>, vector<1x32x32xf32>
    %133 = vector.shape_cast %132 : vector<1x32x32xf32> to vector<32x32xf32>
    %cst_95 = arith.constant dense<0.000000e+00> : vector<32x128xf32>
    %134 = tpu.matmul %133, %131, %cst_95 {dimension_numbers = #tpu.dot_dimension_numbers<[1], [0], [0], [1], [0, 0, 1, 1], [], []>} : vector<32x32xf32>, vector<32x128xf32>, vector<32x128xf32> -> vector<32x128xf32>
    %c9_96 = arith.constant 9 : index
    %c0_97 = arith.constant 0 : index
    %c0_98 = arith.constant 0 : index
    %135 = vector.load %arg5[%c9_96, %c0_97, %c0_98] : memref<10x32x1xf32, #tpu.memory_space<vmem>>, vector<1x32x1xf32>
    %136 = vector.shape_cast %135 : vector<1x32x1xf32> to vector<32x1xf32>
    %137 = vector.broadcast %136 : vector<32x1xf32> to vector<32x128xf32>
    %138 = arith.addf %134, %137 : vector<32x128xf32>
    %139 = math.tanh %138 : vector<32x128xf32>
    %c0_99 = arith.constant 0 : index
    %c0_100 = arith.constant 0 : index
    %140 = vector.load %arg8[%c0_99, %c0_100] : memref<8x32xf32, #tpu.memory_space<vmem>>, vector<8x32xf32>
    %cst_101 = arith.constant dense<0.000000e+00> : vector<8x128xf32>
    %141 = tpu.matmul %140, %139, %cst_101 {dimension_numbers = #tpu.dot_dimension_numbers<[1], [0], [0], [1], [0, 0, 1, 1], [], []>} : vector<8x32xf32>, vector<32x128xf32>, vector<8x128xf32> -> vector<8x128xf32>
    %c0_102 = arith.constant 0 : index
    %c0_103 = arith.constant 0 : index
    %142 = vector.load %arg9[%c0_102, %c0_103] : memref<8x1xf32, #tpu.memory_space<vmem>>, vector<8x1xf32>
    %143 = vector.broadcast %142 : vector<8x1xf32> to vector<8x128xf32>
    %144 = arith.addf %141, %143 : vector<8x128xf32>
    %c0_104 = arith.constant 0 : index
    %c0_105 = arith.constant 0 : index
    %145 = vector.load %arg12[%c0_104, %c0_105] : memref<8x128xf32, #tpu.memory_space<vmem>>, vector<8x128xf32>
    tpu.vector_store %arg12[%c0_104, %c0_105], %144 {strides = array<i32>} : memref<8x128xf32, #tpu.memory_space<vmem>>, vector<8x128xf32>,
    %c0_106 = arith.constant 0 : index
    %c0_107 = arith.constant 0 : index
    %146 = vector.load %arg10[%c0_106, %c0_107] : memref<5x32xf32, #tpu.memory_space<vmem>>, vector<5x32xf32>
    %cst_108 = arith.constant dense<0.000000e+00> : vector<5x128xf32>
    %147 = tpu.matmul %146, %139, %cst_108 {dimension_numbers = #tpu.dot_dimension_numbers<[1], [0], [0], [1], [0, 0, 1, 1], [], []>} : vector<5x32xf32>, vector<32x128xf32>, vector<5x128xf32> -> vector<5x128xf32>
    %c0_109 = arith.constant 0 : index
    %c0_110 = arith.constant 0 : index
    %148 = vector.load %arg11[%c0_109, %c0_110] : memref<5x1xf32, #tpu.memory_space<vmem>>, vector<5x1xf32>
    %149 = vector.broadcast %148 : vector<5x1xf32> to vector<5x128xf32>
    %150 = arith.addf %147, %149 : vector<5x128xf32>
    %c0_111 = arith.constant 0 : index
    %c0_112 = arith.constant 0 : index
    %151 = vector.load %arg13[%c0_111, %c0_112] : memref<5x128xf32, #tpu.memory_space<vmem>>, vector<5x128xf32>
    tpu.vector_store %arg13[%c0_111, %c0_112], %150 {strides = array<i32>} : memref<5x128xf32, #tpu.memory_space<vmem>>, vector<5x128xf32>,
    return
  }
  func.func @transform_0(%arg0: i32) -> (i32, i32) {
    %c0_i32 = arith.constant 0 : i32
    %c0_i32_0 = arith.constant 0 : i32
    return %arg0, %c0_i32 : i32, i32
  }
  func.func @transform_1(%arg0: i32) -> (i32, i32) {
    %c0_i32 = arith.constant 0 : i32
    %c0_i32_0 = arith.constant 0 : i32
    return %arg0, %c0_i32 : i32, i32
  }
  func.func @transform_2(%arg0: i32) -> (i32, i32) {
    %c0_i32 = arith.constant 0 : i32
    %c0_i32_0 = arith.constant 0 : i32
    %c0_i32_1 = arith.constant 0 : i32
    return %c0_i32, %c0_i32_0 : i32, i32
  }
  func.func @transform_3(%arg0: i32) -> (i32, i32, i32) {
    %c0_i32 = arith.constant 0 : i32
    %c0_i32_0 = arith.constant 0 : i32
    %c0_i32_1 = arith.constant 0 : i32
    %c0_i32_2 = arith.constant 0 : i32
    return %c0_i32, %c0_i32_0, %c0_i32_1 : i32, i32, i32
  }
  func.func @transform_4(%arg0: i32) -> (i32, i32, i32) {
    %c0_i32 = arith.constant 0 : i32
    %c0_i32_0 = arith.constant 0 : i32
    %c0_i32_1 = arith.constant 0 : i32
    %c0_i32_2 = arith.constant 0 : i32
    return %c0_i32, %c0_i32_0, %c0_i32_1 : i32, i32, i32
  }
  func.func @transform_5(%arg0: i32) -> (i32, i32) {
    %c0_i32 = arith.constant 0 : i32
    %c0_i32_0 = arith.constant 0 : i32
    %c0_i32_1 = arith.constant 0 : i32
    return %c0_i32, %c0_i32_0 : i32, i32
  }
  func.func @transform_6(%arg0: i32) -> (i32, i32) {
    %c0_i32 = arith.constant 0 : i32
    %c0_i32_0 = arith.constant 0 : i32
    %c0_i32_1 = arith.constant 0 : i32
    return %c0_i32, %c0_i32_0 : i32, i32
  }
  func.func @transform_7(%arg0: i32) -> (i32, i32) {
    %c0_i32 = arith.constant 0 : i32
    %c0_i32_0 = arith.constant 0 : i32
    %c0_i32_1 = arith.constant 0 : i32
    return %c0_i32, %c0_i32_0 : i32, i32
  }
  func.func @transform_8(%arg0: i32) -> (i32, i32) {
    %c0_i32 = arith.constant 0 : i32
    %c0_i32_0 = arith.constant 0 : i32
    %c0_i32_1 = arith.constant 0 : i32
    return %c0_i32, %c0_i32_0 : i32, i32
  }
  func.func @transform_9(%arg0: i32) -> (i32, i32) {
    %c0_i32 = arith.constant 0 : i32
    %c0_i32_0 = arith.constant 0 : i32
    %c0_i32_1 = arith.constant 0 : i32
    return %c0_i32, %c0_i32_0 : i32, i32
  }
  func.func @transform_10(%arg0: i32) -> (i32, i32) {
    %c0_i32 = arith.constant 0 : i32
    %c0_i32_0 = arith.constant 0 : i32
    %c0_i32_1 = arith.constant 0 : i32
    return %c0_i32, %c0_i32_0 : i32, i32
  }
  func.func @transform_11(%arg0: i32) -> (i32, i32) {
    %c0_i32 = arith.constant 0 : i32
    %c0_i32_0 = arith.constant 0 : i32
    return %c0_i32, %arg0 : i32, i32
  }
  func.func @transform_12(%arg0: i32) -> (i32, i32) {
    %c0_i32 = arith.constant 0 : i32
    %c0_i32_0 = arith.constant 0 : i32
    return %c0_i32, %arg0 : i32, i32
  }
}

</mosaic_0001>

<llo_original>
// kernel: wpinn_forward.1
$region0: #{wpinn_forward.1}
  #allocation0 [shape = 'u32[]', space=smem, size = 0x4, offset = 0x4, fixed_abs, tag = 'smem constant byte address 0x4 - core index']
  #allocation1 [shape = 'u32[72,128]{1,0:T(1,128)}', space=vmem, size = 0x9000, scoped, tag = 'internal scratch']
  #allocation2 [shape = 'f32[16,128]{1,0:T(8,128)}', space=vmem, size = 0x2000, scoped, tag = 'scratch operand']
  %s0 = inlined_call_operand.vmem [shape: f32[1,2048], index: 0, kind: input, shape index: {}]
  %s1 = inlined_call_operand.vmem [shape: f32[1,2048], index: 1, kind: input, shape index: {}]
  %s2 = inlined_call_operand.vmem [shape: f32[32,4], index: 2, kind: input, shape index: {}]
  %s3 = inlined_call_operand.vmem [shape: f32[10,32,32], index: 3, kind: input, shape index: {}]
  %s4 = inlined_call_operand.vmem [shape: f32[10,32,1], index: 4, kind: input, shape index: {}]
  %s5 = inlined_call_operand.vmem [shape: f32[32,16], index: 5, kind: input, shape index: {}]
  %s6 = inlined_call_operand.vmem [shape: f32[32,1], index: 6, kind: input, shape index: {}]
  %s7 = inlined_call_operand.vmem [shape: f32[8,32], index: 7, kind: input, shape index: {}]
  %s8 = inlined_call_operand.vmem [shape: f32[8,1], index: 8, kind: input, shape index: {}]
  %s9 = inlined_call_operand.vmem [shape: f32[5,32], index: 9, kind: input, shape index: {}]
  %s10 = inlined_call_operand.vmem [shape: f32[5,1], index: 10, kind: input, shape index: {}]
  %s11 = inlined_call_operand.vmem [shape: f32[8,128], index: 11, kind: output, shape index: {0}]
  %s12 = inlined_call_operand.vmem [shape: f32[5,128], index: 12, kind: output, shape index: {1}]
  %13 = xla_tuple %s11, %s12
  %s14 = sld [smem:[#allocation0]]
  $region62: #{wpinn_forward.1} parent=0
    _
  %s16 = ssub.s32 1, %s14
  %s17 = scalar_select 0, %s16, %s14
  // Predicated region
  $region2: #{wpinn_forward.1} parent=0 // pred_check
    _
  $region3: #{wpinn_forward.1} parent=0 // pred_check_branch
    %19 = sbr.rel (0) target = $region5
  $region4: #{wpinn_forward.1} parent=0 // pred_region
    _
  $region5: #{wpinn_forward.1} parent=0 // pred_fallthru
    _
  // Predicated region
  $region6: #{wpinn_forward.1} parent=0 // pred_check
    _
  $region7: #{wpinn_forward.1} parent=0 // pred_check_branch
    %21 = sbr.rel (0) target = $region9
  $region8: #{wpinn_forward.1} parent=0 // pred_region
    _
  $region9: #{wpinn_forward.1} parent=0 // pred_fallthru
    _
  // Predicated region
  $region10: #{wpinn_forward.1} parent=0 // pred_check
    _
  $region11: #{wpinn_forward.1} parent=0 // pred_check_branch
    %23 = sbr.rel (0) target = $region13
  $region12: #{wpinn_forward.1} parent=0 // pred_region
    _
  $region13: #{wpinn_forward.1} parent=0 // pred_fallthru
    _
  // Predicated region
  $region14: #{wpinn_forward.1} parent=0 // pred_check
    _
  $region15: #{wpinn_forward.1} parent=0 // pred_check_branch
    %25 = sbr.rel (0) target = $region17
  $region16: #{wpinn_forward.1} parent=0 // pred_region
    _
  $region17: #{wpinn_forward.1} parent=0 // pred_fallthru
    _
  // Predicated region
  $region18: #{wpinn_forward.1} parent=0 // pred_check
    _
  $region19: #{wpinn_forward.1} parent=0 // pred_check_branch
    %27 = sbr.rel (0) target = $region21
  $region20: #{wpinn_forward.1} parent=0 // pred_region
    _
  $region21: #{wpinn_forward.1} parent=0 // pred_fallthru
    _
  // Predicated region
  $region22: #{wpinn_forward.1} parent=0 // pred_check
    _
  $region23: #{wpinn_forward.1} parent=0 // pred_check_branch
    %29 = sbr.rel (0) target = $region25
  $region24: #{wpinn_forward.1} parent=0 // pred_region
    _
  $region25: #{wpinn_forward.1} parent=0 // pred_fallthru
    _
  // Predicated region
  $region26: #{wpinn_forward.1} parent=0 // pred_check
    _
  $region27: #{wpinn_forward.1} parent=0 // pred_check_branch
    %31 = sbr.rel (0) target = $region29
  $region28: #{wpinn_forward.1} parent=0 // pred_region
    _
  $region29: #{wpinn_forward.1} parent=0 // pred_fallthru
    _
  // Predicated region
  $region30: #{wpinn_forward.1} parent=0 // pred_check
    _
  $region31: #{wpinn_forward.1} parent=0 // pred_check_branch
    %33 = sbr.rel (0) target = $region33
  $region32: #{wpinn_forward.1} parent=0 // pred_region
    _
  $region33: #{wpinn_forward.1} parent=0 // pred_fallthru
    _
  // Predicated region
  $region34: #{wpinn_forward.1} parent=0 // pred_check
    _
  $region35: #{wpinn_forward.1} parent=0 // pred_check_branch
    %35 = sbr.rel (0) target = $region37
  $region36: #{wpinn_forward.1} parent=0 // pred_region
    _
  $region37: #{wpinn_forward.1} parent=0 // pred_fallthru
    _
  // Predicated region
  $region38: #{wpinn_forward.1} parent=0 // pred_check
    _
  $region39: #{wpinn_forward.1} parent=0 // pred_check_branch
    %37 = sbr.rel (0) target = $region41
  $region40: #{wpinn_forward.1} parent=0 // pred_region
    _
  $region41: #{wpinn_forward.1} parent=0 // pred_fallthru
    _
  // Predicated region
  $region42: #{wpinn_forward.1} parent=0 // pred_check
    _
  $region43: #{wpinn_forward.1} parent=0 // pred_check_branch
    %39 = sbr.rel (0) target = $region45
  $region44: #{wpinn_forward.1} parent=0 // pred_region
    _
  $region45: #{wpinn_forward.1} parent=0 // pred_fallthru
    _
  %v40 = vld [vmem:[%s2] sm:$0xff]
  %v41 = vld [vmem:[%s2 + $0x8] sm:$0xff]
  %v42 = vld [vmem:[%s2 + $0x10] sm:$0xff]
  %v43 = vld [vmem:[%s2 + $0x18] sm:$0xff]
  %v44 = vld [vmem:[%s0] sm:$0xff]
  %v45 = vld [vmem:[%s0 + $0x8] sm:$0xff]
  %47 = vset.pattern.permute.xlu0 0
  %48 = vperm.xlu0 %47, %v40
  %v49 = vpop.permute.xlu0 %48
  %52 = vset.pattern.permute.xlu0 0
  %53 = vperm.xlu0 %52, %v41
  %v54 = vpop.permute.xlu0 %53
  %57 = vset.pattern.permute.xlu0 0
  %58 = vperm.xlu0 %57, %v42
  %v59 = vpop.permute.xlu0 %58
  %62 = vset.pattern.permute.xlu0 0
  %63 = vperm.xlu0 %62, %v43
  %v64 = vpop.permute.xlu0 %63
  %v68 = vperm.slane %v44, 0
  %v69 = vperm.slane %v44, 1
  %v70 = vperm.slane %v44, 2
  %v71 = vperm.slane %v44, 3
  %v72 = vperm.slane %v44, 4
  %v73 = vperm.slane %v44, 5
  %v74 = vperm.slane %v44, 6
  %v75 = vperm.slane %v44, 7
  %v76 = vperm.slane %v45, 0
  %v77 = vperm.slane %v45, 1
  %v78 = vperm.slane %v45, 2
  %v79 = vperm.slane %v45, 3
  %v80 = vperm.slane %v45, 4
  %v81 = vperm.slane %v45, 5
  %v82 = vperm.slane %v45, 6
  %v83 = vperm.slane %v45, 7
  %v100 = vmul.f32 %v49, %v68
  %v101 = vmul.f32 %v49, %v69
  %v102 = vmul.f32 %v49, %v70
  %v103 = vmul.f32 %v49, %v71
  %v104 = vmul.f32 %v49, %v72
  %v105 = vmul.f32 %v49, %v73
  %v106 = vmul.f32 %v49, %v74
  %v107 = vmul.f32 %v49, %v75
  %v108 = vmul.f32 %v49, %v76
  %v109 = vmul.f32 %v49, %v77
  %v110 = vmul.f32 %v49, %v78
  %v111 = vmul.f32 %v49, %v79
  %v112 = vmul.f32 %v49, %v80
  %v113 = vmul.f32 %v49, %v81
  %v114 = vmul.f32 %v49, %v82
  %v115 = vmul.f32 %v49, %v83
  %v116 = vmul.f32 %v54, %v68
  %v117 = vmul.f32 %v54, %v69
  %v118 = vmul.f32 %v54, %v70
  %v119 = vmul.f32 %v54, %v71
  %v120 = vmul.f32 %v54, %v72
  %v121 = vmul.f32 %v54, %v73
  %v122 = vmul.f32 %v54, %v74
  %v123 = vmul.f32 %v54, %v75
  %v124 = vmul.f32 %v54, %v76
  %v125 = vmul.f32 %v54, %v77
  %v126 = vmul.f32 %v54, %v78
  %v127 = vmul.f32 %v54, %v79
  %v128 = vmul.f32 %v54, %v80
  %v129 = vmul.f32 %v54, %v81
  %v130 = vmul.f32 %v54, %v82
  %v131 = vmul.f32 %v54, %v83
  %v132 = vmul.f32 %v59, %v68
  %v133 = vmul.f32 %v59, %v69
  %v134 = vmul.f32 %v59, %v70
  %v135 = vmul.f32 %v59, %v71
  %v136 = vmul.f32 %v59, %v72
  %v137 = vmul.f32 %v59, %v73
  %v138 = vmul.f32 %v59, %v74
  %v139 = vmul.f32 %v59, %v75
  %v140 = vmul.f32 %v59, %v76
  %v141 = vmul.f32 %v59, %v77
  %v142 = vmul.f32 %v59, %v78
  %v143 = vmul.f32 %v59, %v79
  %v144 = vmul.f32 %v59, %v80
  %v145 = vmul.f32 %v59, %v81
  %v146 = vmul.f32 %v59, %v82
  %v147 = vmul.f32 %v59, %v83
  %v148 = vmul.f32 %v64, %v68
  %v149 = vmul.f32 %v64, %v69
  %v150 = vmul.f32 %v64, %v70
  %v151 = vmul.f32 %v64, %v71
  %v152 = vmul.f32 %v64, %v72
  %v153 = vmul.f32 %v64, %v73
  %v154 = vmul.f32 %v64, %v74
  %v155 = vmul.f32 %v64, %v75
  %v156 = vmul.f32 %v64, %v76
  %v157 = vmul.f32 %v64, %v77
  %v158 = vmul.f32 %v64, %v78
  %v159 = vmul.f32 %v64, %v79
  %v160 = vmul.f32 %v64, %v80
  %v161 = vmul.f32 %v64, %v81
  %v162 = vmul.f32 %v64, %v82
  %v163 = vmul.f32 %v64, %v83
  %v164 = vld [vmem:[%s1] sm:$0xff]
  %v165 = vld [vmem:[%s1 + $0x8] sm:$0xff]
  %166 = vset.pattern.permute.xlu0 1
  %167 = vperm.xlu0 %166, %v40
  %v168 = vpop.permute.xlu0 %167
  %170 = vset.pattern.permute.xlu0 1
  %171 = vperm.xlu0 %170, %v41
  %v172 = vpop.permute.xlu0 %171
  %174 = vset.pattern.permute.xlu0 1
  %175 = vperm.xlu0 %174, %v42
  %v176 = vpop.permute.xlu0 %175
  %178 = vset.pattern.permute.xlu0 1
  %179 = vperm.xlu0 %178, %v43
  %v180 = vpop.permute.xlu0 %179
  %v184 = vperm.slane %v164, 0
  %v185 = vperm.slane %v164, 1
  %v186 = vperm.slane %v164, 2
  %v187 = vperm.slane %v164, 3
  %v188 = vperm.slane %v164, 4
  %v189 = vperm.slane %v164, 5
  %v190 = vperm.slane %v164, 6
  %v191 = vperm.slane %v164, 7
  %v192 = vperm.slane %v165, 0
  %v193 = vperm.slane %v165, 1
  %v194 = vperm.slane %v165, 2
  %v195 = vperm.slane %v165, 3
  %v196 = vperm.slane %v165, 4
  %v197 = vperm.slane %v165, 5
  %v198 = vperm.slane %v165, 6
  %v199 = vperm.slane %v165, 7
  %v216 = vmul.f32 %v168, %v184
  %v217 = vmul.f32 %v168, %v185
  %v218 = vmul.f32 %v168, %v186
  %v219 = vmul.f32 %v168, %v187
  %v220 = vmul.f32 %v168, %v188
  %v221 = vmul.f32 %v168, %v189
  %v222 = vmul.f32 %v168, %v190
  %v223 = vmul.f32 %v168, %v191
  %v224 = vmul.f32 %v168, %v192
  %v225 = vmul.f32 %v168, %v193
  %v226 = vmul.f32 %v168, %v194
  %v227 = vmul.f32 %v168, %v195
  %v228 = vmul.f32 %v168, %v196
  %v229 = vmul.f32 %v168, %v197
  %v230 = vmul.f32 %v168, %v198
  %v231 = vmul.f32 %v168, %v199
  %v232 = vmul.f32 %v172, %v184
  %v233 = vmul.f32 %v172, %v185
  %v234 = vmul.f32 %v172, %v186
  %v235 = vmul.f32 %v172, %v187
  %v236 = vmul.f32 %v172, %v188
  %v237 = vmul.f32 %v172, %v189
  %v238 = vmul.f32 %v172, %v190
  %v239 = vmul.f32 %v172, %v191
  %v240 = vmul.f32 %v172, %v192
  %v241 = vmul.f32 %v172, %v193
  %v242 = vmul.f32 %v172, %v194
  %v243 = vmul.f32 %v172, %v195
  %v244 = vmul.f32 %v172, %v196
  %v245 = vmul.f32 %v172, %v197
  %v246 = vmul.f32 %v172, %v198
  %v247 = vmul.f32 %v172, %v199
  %v248 = vmul.f32 %v176, %v184
  %v249 = vmul.f32 %v176, %v185
  %v250 = vmul.f32 %v176, %v186
  %v251 = vmul.f32 %v176, %v187
  %v252 = vmul.f32 %v176, %v188
  %v253 = vmul.f32 %v176, %v189
  %v254 = vmul.f32 %v176, %v190
  %v255 = vmul.f32 %v176, %v191
  %v256 = vmul.f32 %v176, %v192
  %v257 = vmul.f32 %v176, %v193
  %v258 = vmul.f32 %v176, %v194
  %v259 = vmul.f32 %v176, %v195
  %v260 = vmul.f32 %v176, %v196
  %v261 = vmul.f32 %v176, %v197
  %v262 = vmul.f32 %v176, %v198
  %v263 = vmul.f32 %v176, %v199
  %v264 = vmul.f32 %v180, %v184
  %v265 = vmul.f32 %v180, %v185
  %v266 = vmul.f32 %v180, %v186
  %v267 = vmul.f32 %v180, %v187
  %v268 = vmul.f32 %v180, %v188
  %v269 = vmul.f32 %v180, %v189
  %v270 = vmul.f32 %v180, %v190
  %v271 = vmul.f32 %v180, %v191
  %v272 = vmul.f32 %v180, %v192
  %v273 = vmul.f32 %v180, %v193
  %v274 = vmul.f32 %v180, %v194
  %v275 = vmul.f32 %v180, %v195
  %v276 = vmul.f32 %v180, %v196
  %v277 = vmul.f32 %v180, %v197
  %v278 = vmul.f32 %v180, %v198
  %v279 = vmul.f32 %v180, %v199
  %v280 = vadd.f32 %v100, %v216
  %v281 = vadd.f32 %v101, %v217
  %v282 = vadd.f32 %v102, %v218
  %v283 = vadd.f32 %v103, %v219
  %v284 = vadd.f32 %v104, %v220
  %v285 = vadd.f32 %v105, %v221
  %v286 = vadd.f32 %v106, %v222
  %v287 = vadd.f32 %v107, %v223
  %v288 = vadd.f32 %v108, %v224
  %v289 = vadd.f32 %v109, %v225
  %v290 = vadd.f32 %v110, %v226
  %v291 = vadd.f32 %v111, %v227
  %v292 = vadd.f32 %v112, %v228
  %v293 = vadd.f32 %v113, %v229
  %v294 = vadd.f32 %v114, %v230
  %v295 = vadd.f32 %v115, %v231
  %v296 = vadd.f32 %v116, %v232
  %v297 = vadd.f32 %v117, %v233
  %v298 = vadd.f32 %v118, %v234
  %v299 = vadd.f32 %v119, %v235
  %v300 = vadd.f32 %v120, %v236
  %v301 = vadd.f32 %v121, %v237
  %v302 = vadd.f32 %v122, %v238
  %v303 = vadd.f32 %v123, %v239
  %v304 = vadd.f32 %v124, %v240
  %v305 = vadd.f32 %v125, %v241
  %v306 = vadd.f32 %v126, %v242
  %v307 = vadd.f32 %v127, %v243
  %v308 = vadd.f32 %v128, %v244
  %v309 = vadd.f32 %v129, %v245
  %v310 = vadd.f32 %v130, %v246
  %v311 = vadd.f32 %v131, %v247
  %v312 = vadd.f32 %v132, %v248
  %v313 = vadd.f32 %v133, %v249
  %v314 = vadd.f32 %v134, %v250
  %v315 = vadd.f32 %v135, %v251
  %v316 = vadd.f32 %v136, %v252
  %v317 = vadd.f32 %v137, %v253
  %v318 = vadd.f32 %v138, %v254
  %v319 = vadd.f32 %v139, %v255
  %v320 = vadd.f32 %v140, %v256
  %v321 = vadd.f32 %v141, %v257
  %v322 = vadd.f32 %v142, %v258
  %v323 = vadd.f32 %v143, %v259
  %v324 = vadd.f32 %v144, %v260
  %v325 = vadd.f32 %v145, %v261
  %v326 = vadd.f32 %v146, %v262
  %v327 = vadd.f32 %v147, %v263
  %v328 = vadd.f32 %v148, %v264
  %v329 = vadd.f32 %v149, %v265
  %v330 = vadd.f32 %v150, %v266
  %v331 = vadd.f32 %v151, %v267
  %v332 = vadd.f32 %v152, %v268
  %v333 = vadd.f32 %v153, %v269
  %v334 = vadd.f32 %v154, %v270
  %v335 = vadd.f32 %v155, %v271
  %v336 = vadd.f32 %v156, %v272
  %v337 = vadd.f32 %v157, %v273
  %v338 = vadd.f32 %v158, %v274
  %v339 = vadd.f32 %v159, %v275
  %v340 = vadd.f32 %v160, %v276
  %v341 = vadd.f32 %v161, %v277
  %v342 = vadd.f32 %v162, %v278
  %v343 = vadd.f32 %v163, %v279
  %344 = vset.pattern.permute.xlu0 2
  %345 = vperm.xlu0 %344, %v40
  %v346 = vpop.permute.xlu0 %345
  %348 = vset.pattern.permute.xlu0 2
  %349 = vperm.xlu0 %348, %v41
  %v350 = vpop.permute.xlu0 %349
  %352 = vset.pattern.permute.xlu0 2
  %353 = vperm.xlu0 %352, %v42
  %v354 = vpop.permute.xlu0 %353
  %356 = vset.pattern.permute.xlu0 2
  %357 = vperm.xlu0 %356, %v43
  %v358 = vpop.permute.xlu0 %357
  %v360 = vadd.f32 %v280, %v346
  %v361 = vadd.f32 %v281, %v346
  %v362 = vadd.f32 %v282, %v346
  %v363 = vadd.f32 %v283, %v346
  %v364 = vadd.f32 %v284, %v346
  %v365 = vadd.f32 %v285, %v346
  %v366 = vadd.f32 %v286, %v346
  %v367 = vadd.f32 %v287, %v346
  %v368 = vadd.f32 %v288, %v346
  %v369 = vadd.f32 %v289, %v346
  %v370 = vadd.f32 %v290, %v346
  %v371 = vadd.f32 %v291, %v346
  %v372 = vadd.f32 %v292, %v346
  %v373 = vadd.f32 %v293, %v346
  %v374 = vadd.f32 %v294, %v346
  %v375 = vadd.f32 %v295, %v346
  %v376 = vadd.f32 %v296, %v350
  %v377 = vadd.f32 %v297, %v350
  %v378 = vadd.f32 %v298, %v350
  %v379 = vadd.f32 %v299, %v350
  %v380 = vadd.f32 %v300, %v350
  %v381 = vadd.f32 %v301, %v350
  %v382 = vadd.f32 %v302, %v350
  %v383 = vadd.f32 %v303, %v350
  %v384 = vadd.f32 %v304, %v350
  %v385 = vadd.f32 %v305, %v350
  %v386 = vadd.f32 %v306, %v350
  %v387 = vadd.f32 %v307, %v350
  %v388 = vadd.f32 %v308, %v350
  %v389 = vadd.f32 %v309, %v350
  %v390 = vadd.f32 %v310, %v350
  %v391 = vadd.f32 %v311, %v350
  %v392 = vadd.f32 %v312, %v354
  %v393 = vadd.f32 %v313, %v354
  %v394 = vadd.f32 %v314, %v354
  %v395 = vadd.f32 %v315, %v354
  %v396 = vadd.f32 %v316, %v354
  %v397 = vadd.f32 %v317, %v354
  %v398 = vadd.f32 %v318, %v354
  %v399 = vadd.f32 %v319, %v354
  %v400 = vadd.f32 %v320, %v354
  %v401 = vadd.f32 %v321, %v354
  %v402 = vadd.f32 %v322, %v354
  %v403 = vadd.f32 %v323, %v354
  %v404 = vadd.f32 %v324, %v354
  %v405 = vadd.f32 %v325, %v354
  %v406 = vadd.f32 %v326, %v354
  %v407 = vadd.f32 %v327, %v354
  %v408 = vadd.f32 %v328, %v358
  %v409 = vadd.f32 %v329, %v358
  %v410 = vadd.f32 %v330, %v358
  %v411 = vadd.f32 %v331, %v358
  %v412 = vadd.f32 %v332, %v358
  %v413 = vadd.f32 %v333, %v358
  %v414 = vadd.f32 %v334, %v358
  %v415 = vadd.f32 %v335, %v358
  %v416 = vadd.f32 %v336, %v358
  %v417 = vadd.f32 %v337, %v358
  %v418 = vadd.f32 %v338, %v358
  %v419 = vadd.f32 %v339, %v358
  %v420 = vadd.f32 %v340, %v358
  %v421 = vadd.f32 %v341, %v358
  %v422 = vadd.f32 %v342, %v358
  %v423 = vadd.f32 %v343, %v358
  %v424 = vtanh.pop %v360
  %v425 = vtanh.pop %v361
  %v426 = vtanh.pop %v362
  %v427 = vtanh.pop %v363
  %v428 = vtanh.pop %v364
  %v429 = vtanh.pop %v365
  %v430 = vtanh.pop %v366
  %v431 = vtanh.pop %v367
  %v432 = vtanh.pop %v368
  %v433 = vtanh.pop %v369
  %v434 = vtanh.pop %v370
  %v435 = vtanh.pop %v371
  %v436 = vtanh.pop %v372
  %v437 = vtanh.pop %v373
  %v438 = vtanh.pop %v374
  %v439 = vtanh.pop %v375
  %v440 = vtanh.pop %v376
  %v441 = vtanh.pop %v377
  %v442 = vtanh.pop %v378
  %v443 = vtanh.pop %v379
  %v444 = vtanh.pop %v380
  %v445 = vtanh.pop %v381
  %v446 = vtanh.pop %v382
  %v447 = vtanh.pop %v383
  %v448 = vtanh.pop %v384
  %v449 = vtanh.pop %v385
  %v450 = vtanh.pop %v386
  %v451 = vtanh.pop %v387
  %v452 = vtanh.pop %v388
  %v453 = vtanh.pop %v389
  %v454 = vtanh.pop %v390
  %v455 = vtanh.pop %v391
  %v456 = vtanh.pop %v392
  %v457 = vtanh.pop %v393
  %v458 = vtanh.pop %v394
  %v459 = vtanh.pop %v395
  %v460 = vtanh.pop %v396
  %v461 = vtanh.pop %v397
  %v462 = vtanh.pop %v398
  %v463 = vtanh.pop %v399
  %v464 = vtanh.pop %v400
  %v465 = vtanh.pop %v401
  %v466 = vtanh.pop %v402
  %v467 = vtanh.pop %v403
  %v468 = vtanh.pop %v404
  %v469 = vtanh.pop %v405
  %v470 = vtanh.pop %v406
  %v471 = vtanh.pop %v407
  %v472 = vtanh.pop %v408
  %v473 = vtanh.pop %v409
  %v474 = vtanh.pop %v410
  %v475 = vtanh.pop %v411
  %v476 = vtanh.pop %v412
  %v477 = vtanh.pop %v413
  %v478 = vtanh.pop %v414
  %v479 = vtanh.pop %v415
  %v480 = vtanh.pop %v416
  %v481 = vtanh.pop %v417
  %v482 = vtanh.pop %v418
  %v483 = vtanh.pop %v419
  %v484 = vtanh.pop %v420
  %v485 = vtanh.pop %v421
  %v486 = vtanh.pop %v422
  %v487 = vtanh.pop %v423
  %v488 = vld [vmem:[%s3] sm:$0xff]
  %v489 = vld [vmem:[%s3 + $0x8] sm:$0xff]
  %v490 = vld [vmem:[%s3 + $0x10] sm:$0xff]
  %v491 = vld [vmem:[%s3 + $0x18] sm:$0xff]
  %v492 = vld [vmem:[%s4] sm:$0xff]
  %v493 = vld [vmem:[%s4 + $0x8] sm:$0xff]
  %v494 = vld [vmem:[%s4 + $0x10] sm:$0xff]
  %v495 = vld [vmem:[%s4 + $0x18] sm:$0xff]
  %497 = vset.pattern.permute.xlu0 0
  %498 = vperm.xlu0 %497, %v492
  %v499 = vpop.permute.xlu0 %498
  %502 = vset.pattern.permute.xlu0 0
  %503 = vperm.xlu0 %502, %v493
  %v504 = vpop.permute.xlu0 %503
  %507 = vset.pattern.permute.xlu0 0
  %508 = vperm.xlu0 %507, %v494
  %v509 = vpop.permute.xlu0 %508
  %512 = vset.pattern.permute.xlu0 0
  %513 = vperm.xlu0 %512, %v495
  %v514 = vpop.permute.xlu0 %513
  %vm516 = vcmask 261120
  %v518 = vsel %vm516, %v488, 0
  %v521 = vsel %vm516, %v489, 0
  %v524 = vsel %vm516, %v490, 0
  %v527 = vsel %vm516, %v491, 0
  %529 = vmatpush.msra.mxu0 0.0
  %530 = vmatpush.msra.mxu0 0.0
  %531 = vmatpush.msra.mxu0 0.0
  %532 = vmatpush.msra.mxu0 0.0
  %533 = vmatpush.msra.mxu0 0.0
  %534 = vmatpush.msra.mxu0 0.0
  %535 = vmatpush.msra.mxu0 0.0
  %536 = vmatpush.msra.mxu0 0.0
  %537 = vmatpush.msra.mxu0 0.0
  %538 = vmatpush.msra.mxu0 0.0
  %539 = vmatpush.msra.mxu0 0.0
  %540 = vmatpush.msra.mxu0 0.0
  %541 = vmatpush.msra.mxu0 %v472
  %542 = vmatpush.msra.mxu0 %v456
  %543 = vmatpush.msra.mxu0 %v440
  %544 = vmatpush.msra.mxu0 %v424
  %545 = vmatmul.f32.gmra.mxu0 %v518
  %v546 = vpop.f32.mrf.mxu0
  %v547 = vadd.f32 %v499, %v546
  %548 = vmatmul.f32.gmra.mxu0 %v521
  %v549 = vpop.f32.mrf.mxu0
  %v550 = vadd.f32 %v504, %v549
  %551 = vmatmul.f32.gmra.mxu0 %v524
  %v552 = vpop.f32.mrf.mxu0
  %v553 = vadd.f32 %v509, %v552
  %554 = vmatmul.f32.gmra.mxu0 %v527
  %v555 = vpop.f32.mrf.mxu0
  %v556 = vadd.f32 %v514, %v555
  %557 = vdwg.mxu0
  %558 = vmatpush.msra.mxu0 0.0
  %559 = vmatpush.msra.mxu0 0.0
  %560 = vmatpush.msra.mxu0 0.0
  %561 = vmatpush.msra.mxu0 0.0
  %562 = vmatpush.msra.mxu0 0.0
  %563 = vmatpush.msra.mxu0 0.0
  %564 = vmatpush.msra.mxu0 0.0
  %565 = vmatpush.msra.mxu0 0.0
  %566 = vmatpush.msra.mxu0 0.0
  %567 = vmatpush.msra.mxu0 0.0
  %568 = vmatpush.msra.mxu0 0.0
  %569 = vmatpush.msra.mxu0 0.0
  %570 = vmatpush.msra.mxu0 %v473
  %571 = vmatpush.msra.mxu0 %v457
  %572 = vmatpush.msra.mxu0 %v441
  %573 = vmatpush.msra.mxu0 %v425
  %574 = vmatmul.f32.gmra.mxu0 %v518
  %v575 = vpop.f32.mrf.mxu0
  %v576 = vadd.f32 %v499, %v575
  %577 = vmatmul.f32.gmra.mxu0 %v521
  %v578 = vpop.f32.mrf.mxu0
  %v579 = vadd.f32 %v504, %v578
  %580 = vmatmul.f32.gmra.mxu0 %v524
  %v581 = vpop.f32.mrf.mxu0
  %v582 = vadd.f32 %v509, %v581
  %583 = vmatmul.f32.gmra.mxu0 %v527
  %v584 = vpop.f32.mrf.mxu0
  %v585 = vadd.f32 %v514, %v584
  %586 = vdwg.mxu0
  %587 = vmatpush.msra.mxu0 0.0
  %588 = vmatpush.msra.mxu0 0.0
  %589 = vmatpush.msra.mxu0 0.0
  %590 = vmatpush.msra.mxu0 0.0
  %591 = vmatpush.msra.mxu0 0.0
  %592 = vmatpush.msra.mxu0 0.0
  %593 = vmatpush.msra.mxu0 0.0
  %594 = vmatpush.msra.mxu0 0.0
  %595 = vmatpush.msra.mxu0 0.0
  %596 = vmatpush.msra.mxu0 0.0
  %597 = vmatpush.msra.mxu0 0.0
  %598 = vmatpush.msra.mxu0 0.0
  %599 = vmatpush.msra.mxu0 %v474
  %600 = vmatpush.msra.mxu0 %v458
  %601 = vmatpush.msra.mxu0 %v442
  %602 = vmatpush.msra.mxu0 %v426
  %603 = vmatmul.f32.gmra.mxu0 %v518
  %v604 = vpop.f32.mrf.mxu0
  %v605 = vadd.f32 %v499, %v604
  %606 = vmatmul.f32.gmra.mxu0 %v521
  %v607 = vpop.f32.mrf.mxu0
  %v608 = vadd.f32 %v504, %v607
  %609 = vmatmul.f32.gmra.mxu0 %v524
  %v610 = vpop.f32.mrf.mxu0
  %v611 = vadd.f32 %v509, %v610
  %612 = vmatmul.f32.gmra.mxu0 %v527
  %v613 = vpop.f32.mrf.mxu0
  %v614 = vadd.f32 %v514, %v613
  %615 = vdwg.mxu0
  %616 = vmatpush.msra.mxu0 0.0
  %617 = vmatpush.msra.mxu0 0.0
  %618 = vmatpush.msra.mxu0 0.0
  %619 = vmatpush.msra.mxu0 0.0
  %620 = vmatpush.msra.mxu0 0.0
  %621 = vmatpush.msra.mxu0 0.0
  %622 = vmatpush.msra.mxu0 0.0
  %623 = vmatpush.msra.mxu0 0.0
  %624 = vmatpush.msra.mxu0 0.0
  %625 = vmatpush.msra.mxu0 0.0
  %626 = vmatpush.msra.mxu0 0.0
  %627 = vmatpush.msra.mxu0 0.0
  %628 = vmatpush.msra.mxu0 %v475
  %629 = vmatpush.msra.mxu0 %v459
  %630 = vmatpush.msra.mxu0 %v443
  %631 = vmatpush.msra.mxu0 %v427
  %632 = vmatmul.f32.gmra.mxu0 %v518
  %v633 = vpop.f32.mrf.mxu0
  %v634 = vadd.f32 %v499, %v633
  %635 = vmatmul.f32.gmra.mxu0 %v521
  %v636 = vpop.f32.mrf.mxu0
  %v637 = vadd.f32 %v504, %v636
  %638 = vmatmul.f32.gmra.mxu0 %v524
  %v639 = vpop.f32.mrf.mxu0
  %v640 = vadd.f32 %v509, %v639
  %641 = vmatmul.f32.gmra.mxu0 %v527
  %v642 = vpop.f32.mrf.mxu0
  %v643 = vadd.f32 %v514, %v642
  %644 = vdwg.mxu0
  %645 = vmatpush.msra.mxu0 0.0
  %646 = vmatpush.msra.mxu0 0.0
  %647 = vmatpush.msra.mxu0 0.0
  %648 = vmatpush.msra.mxu0 0.0
  %649 = vmatpush.msra.mxu0 0.0
  %650 = vmatpush.msra.mxu0 0.0
  %651 = vmatpush.msra.mxu0 0.0
  %652 = vmatpush.msra.mxu0 0.0
  %653 = vmatpush.msra.mxu0 0.0
  %654 = vmatpush.msra.mxu0 0.0
  %655 = vmatpush.msra.mxu0 0.0
  %656 = vmatpush.msra.mxu0 0.0
  %657 = vmatpush.msra.mxu0 %v476
  %658 = vmatpush.msra.mxu0 %v460
  %659 = vmatpush.msra.mxu0 %v444
  %660 = vmatpush.msra.mxu0 %v428
  %661 = vmatmul.f32.gmra.mxu0 %v518
  %v662 = vpop.f32.mrf.mxu0
  %v663 = vadd.f32 %v499, %v662
  %664 = vmatmul.f32.gmra.mxu0 %v521
  %v665 = vpop.f32.mrf.mxu0
  %v666 = vadd.f32 %v504, %v665
  %667 = vmatmul.f32.gmra.mxu0 %v524
  %v668 = vpop.f32.mrf.mxu0
  %v669 = vadd.f32 %v509, %v668
  %670 = vmatmul.f32.gmra.mxu0 %v527
  %v671 = vpop.f32.mrf.mxu0
  %v672 = vadd.f32 %v514, %v671
  %673 = vdwg.mxu0
  %674 = vmatpush.msra.mxu0 0.0
  %675 = vmatpush.msra.mxu0 0.0
  %676 = vmatpush.msra.mxu0 0.0
  %677 = vmatpush.msra.mxu0 0.0
  %678 = vmatpush.msra.mxu0 0.0
  %679 = vmatpush.msra.mxu0 0.0
  %680 = vmatpush.msra.mxu0 0.0
  %681 = vmatpush.msra.mxu0 0.0
  %682 = vmatpush.msra.mxu0 0.0
  %683 = vmatpush.msra.mxu0 0.0
  %684 = vmatpush.msra.mxu0 0.0
  %685 = vmatpush.msra.mxu0 0.0
  %686 = vmatpush.msra.mxu0 %v477
  %687 = vmatpush.msra.mxu0 %v461
  %688 = vmatpush.msra.mxu0 %v445
  %689 = vmatpush.msra.mxu0 %v429
  %690 = vmatmul.f32.gmra.mxu0 %v518
  %v691 = vpop.f32.mrf.mxu0
  %v692 = vadd.f32 %v499, %v691
  %693 = vmatmul.f32.gmra.mxu0 %v521
  %v694 = vpop.f32.mrf.mxu0
  %v695 = vadd.f32 %v504, %v694
  %696 = vmatmul.f32.gmra.mxu0 %v524
  %v697 = vpop.f32.mrf.mxu0
  %v698 = vadd.f32 %v509, %v697
  %699 = vmatmul.f32.gmra.mxu0 %v527
  %v700 = vpop.f32.mrf.mxu0
  %v701 = vadd.f32 %v514, %v700
  %702 = vdwg.mxu0
  %703 = vmatpush.msra.mxu0 0.0
  %704 = vmatpush.msra.mxu0 0.0
  %705 = vmatpush.msra.mxu0 0.0
  %706 = vmatpush.msra.mxu0 0.0
  %707 = vmatpush.msra.mxu0 0.0
  %708 = vmatpush.msra.mxu0 0.0
  %709 = vmatpush.msra.mxu0 0.0
  %710 = vmatpush.msra.mxu0 0.0
  %711 = vmatpush.msra.mxu0 0.0
  %712 = vmatpush.msra.mxu0 0.0
  %713 = vmatpush.msra.mxu0 0.0
  %714 = vmatpush.msra.mxu0 0.0
  %715 = vmatpush.msra.mxu0 %v478
  %716 = vmatpush.msra.mxu0 %v462
  %717 = vmatpush.msra.mxu0 %v446
  %718 = vmatpush.msra.mxu0 %v430
  %719 = vmatmul.f32.gmra.mxu0 %v518
  %v720 = vpop.f32.mrf.mxu0
  %v721 = vadd.f32 %v499, %v720
  %722 = vmatmul.f32.gmra.mxu0 %v521
  %v723 = vpop.f32.mrf.mxu0
  %v724 = vadd.f32 %v504, %v723
  %725 = vmatmul.f32.gmra.mxu0 %v524
  %v726 = vpop.f32.mrf.mxu0
  %v727 = vadd.f32 %v509, %v726
  %728 = vmatmul.f32.gmra.mxu0 %v527
  %v729 = vpop.f32.mrf.mxu0
  %v730 = vadd.f32 %v514, %v729
  %731 = vdwg.mxu0
  %732 = vmatpush.msra.mxu0 0.0
  %733 = vmatpush.msra.mxu0 0.0
  %734 = vmatpush.msra.mxu0 0.0
  %735 = vmatpush.msra.mxu0 0.0
  %736 = vmatpush.msra.mxu0 0.0
  %737 = vmatpush.msra.mxu0 0.0
  %738 = vmatpush.msra.mxu0 0.0
  %739 = vmatpush.msra.mxu0 0.0
  %740 = vmatpush.msra.mxu0 0.0
  %741 = vmatpush.msra.mxu0 0.0
  %742 = vmatpush.msra.mxu0 0.0
  %743 = vmatpush.msra.mxu0 0.0
  %744 = vmatpush.msra.mxu0 %v479
  %745 = vmatpush.msra.mxu0 %v463
  %746 = vmatpush.msra.mxu0 %v447
  %747 = vmatpush.msra.mxu0 %v431
  %748 = vmatmul.f32.gmra.mxu0 %v518
  %v749 = vpop.f32.mrf.mxu0
  %v750 = vadd.f32 %v499, %v749
  %751 = vmatmul.f32.gmra.mxu0 %v521
  %v752 = vpop.f32.mrf.mxu0
  %v753 = vadd.f32 %v504, %v752
  %754 = vmatmul.f32.gmra.mxu0 %v524
  %v755 = vpop.f32.mrf.mxu0
  %v756 = vadd.f32 %v509, %v755
  %757 = vmatmul.f32.gmra.mxu0 %v527
  %v758 = vpop.f32.mrf.mxu0
  %v759 = vadd.f32 %v514, %v758
  %760 = vdwg.mxu0
  %761 = vmatpush.msra.mxu0 0.0
  %762 = vmatpush.msra.mxu0 0.0
  %763 = vmatpush.msra.mxu0 0.0
  %764 = vmatpush.msra.mxu0 0.0
  %765 = vmatpush.msra.mxu0 0.0
  %766 = vmatpush.msra.mxu0 0.0
  %767 = vmatpush.msra.mxu0 0.0
  %768 = vmatpush.msra.mxu0 0.0
  %769 = vmatpush.msra.mxu0 0.0
  %770 = vmatpush.msra.mxu0 0.0
  %771 = vmatpush.msra.mxu0 0.0
  %772 = vmatpush.msra.mxu0 0.0
  %773 = vmatpush.msra.mxu0 %v480
  %774 = vmatpush.msra.mxu0 %v464
  %775 = vmatpush.msra.mxu0 %v448
  %776 = vmatpush.msra.mxu0 %v432
  %777 = vmatmul.f32.gmra.mxu0 %v518
  %v778 = vpop.f32.mrf.mxu0
  %v779 = vadd.f32 %v499, %v778
  %780 = vmatmul.f32.gmra.mxu0 %v521
  %v781 = vpop.f32.mrf.mxu0
  %v782 = vadd.f32 %v504, %v781
  %783 = vmatmul.f32.gmra.mxu0 %v524
  %v784 = vpop.f32.mrf.mxu0
  %v785 = vadd.f32 %v509, %v784
  %786 = vmatmul.f32.gmra.mxu0 %v527
  %v787 = vpop.f32.mrf.mxu0
  %v788 = vadd.f32 %v514, %v787
  %789 = vdwg.mxu0
  %790 = vmatpush.msra.mxu0 0.0
  %791 = vmatpush.msra.mxu0 0.0
  %792 = vmatpush.msra.mxu0 0.0
  %793 = vmatpush.msra.mxu0 0.0
  %794 = vmatpush.msra.mxu0 0.0
  %795 = vmatpush.msra.mxu0 0.0
  %796 = vmatpush.msra.mxu0 0.0
  %797 = vmatpush.msra.mxu0 0.0
  %798 = vmatpush.msra.mxu0 0.0
  %799 = vmatpush.msra.mxu0 0.0
  %800 = vmatpush.msra.mxu0 0.0
  %801 = vmatpush.msra.mxu0 0.0
  %802 = vmatpush.msra.mxu0 %v481
  %803 = vmatpush.msra.mxu0 %v465
  %804 = vmatpush.msra.mxu0 %v449
  %805 = vmatpush.msra.mxu0 %v433
  %806 = vmatmul.f32.gmra.mxu0 %v518
  %v807 = vpop.f32.mrf.mxu0
  %v808 = vadd.f32 %v499, %v807
  %809 = vmatmul.f32.gmra.mxu0 %v521
  %v810 = vpop.f32.mrf.mxu0
  %v811 = vadd.f32 %v504, %v810
  %812 = vmatmul.f32.gmra.mxu0 %v524
  %v813 = vpop.f32.mrf.mxu0
  %v814 = vadd.f32 %v509, %v813
  %815 = vmatmul.f32.gmra.mxu0 %v527
  %v816 = vpop.f32.mrf.mxu0
  %v817 = vadd.f32 %v514, %v816
  %818 = vdwg.mxu0
  %819 = vmatpush.msra.mxu0 0.0
  %820 = vmatpush.msra.mxu0 0.0
  %821 = vmatpush.msra.mxu0 0.0
  %822 = vmatpush.msra.mxu0 0.0
  %823 = vmatpush.msra.mxu0 0.0
  %824 = vmatpush.msra.mxu0 0.0
  %825 = vmatpush.msra.mxu0 0.0
  %826 = vmatpush.msra.mxu0 0.0
  %827 = vmatpush.msra.mxu0 0.0
  %828 = vmatpush.msra.mxu0 0.0
  %829 = vmatpush.msra.mxu0 0.0
  %830 = vmatpush.msra.mxu0 0.0
  %831 = vmatpush.msra.mxu0 %v482
  %832 = vmatpush.msra.mxu0 %v466
  %833 = vmatpush.msra.mxu0 %v450
  %834 = vmatpush.msra.mxu0 %v434
  %835 = vmatmul.f32.gmra.mxu0 %v518
  %v836 = vpop.f32.mrf.mxu0
  %v837 = vadd.f32 %v499, %v836
  %838 = vmatmul.f32.gmra.mxu0 %v521
  %v839 = vpop.f32.mrf.mxu0
  %v840 = vadd.f32 %v504, %v839
  %841 = vmatmul.f32.gmra.mxu0 %v524
  %v842 = vpop.f32.mrf.mxu0
  %v843 = vadd.f32 %v509, %v842
  %844 = vmatmul.f32.gmra.mxu0 %v527
  %v845 = vpop.f32.mrf.mxu0
  %v846 = vadd.f32 %v514, %v845
  %847 = vdwg.mxu0
  %848 = vmatpush.msra.mxu0 0.0
  %849 = vmatpush.msra.mxu0 0.0
  %850 = vmatpush.msra.mxu0 0.0
  %851 = vmatpush.msra.mxu0 0.0
  %852 = vmatpush.msra.mxu0 0.0
  %853 = vmatpush.msra.mxu0 0.0
  %854 = vmatpush.msra.mxu0 0.0
  %855 = vmatpush.msra.mxu0 0.0
  %856 = vmatpush.msra.mxu0 0.0
  %857 = vmatpush.msra.mxu0 0.0
  %858 = vmatpush.msra.mxu0 0.0
  %859 = vmatpush.msra.mxu0 0.0
  %860 = vmatpush.msra.mxu0 %v483
  %861 = vmatpush.msra.mxu0 %v467
  %862 = vmatpush.msra.mxu0 %v451
  %863 = vmatpush.msra.mxu0 %v435
  %864 = vmatmul.f32.gmra.mxu0 %v518
  %v865 = vpop.f32.mrf.mxu0
  %v866 = vadd.f32 %v499, %v865
  %867 = vmatmul.f32.gmra.mxu0 %v521
  %v868 = vpop.f32.mrf.mxu0
  %v869 = vadd.f32 %v504, %v868
  %870 = vmatmul.f32.gmra.mxu0 %v524
  %v871 = vpop.f32.mrf.mxu0
  %v872 = vadd.f32 %v509, %v871
  %873 = vmatmul.f32.gmra.mxu0 %v527
  %v874 = vpop.f32.mrf.mxu0
  %v875 = vadd.f32 %v514, %v874
  %876 = vdwg.mxu0
  %877 = vmatpush.msra.mxu0 0.0
  %878 = vmatpush.msra.mxu0 0.0
  %879 = vmatpush.msra.mxu0 0.0
  %880 = vmatpush.msra.mxu0 0.0
  %881 = vmatpush.msra.mxu0 0.0
  %882 = vmatpush.msra.mxu0 0.0
  %883 = vmatpush.msra.mxu0 0.0
  %884 = vmatpush.msra.mxu0 0.0
  %885 = vmatpush.msra.mxu0 0.0
  %886 = vmatpush.msra.mxu0 0.0
  %887 = vmatpush.msra.mxu0 0.0
  %888 = vmatpush.msra.mxu0 0.0
  %889 = vmatpush.msra.mxu0 %v484
  %890 = vmatpush.msra.mxu0 %v468
  %891 = vmatpush.msra.mxu0 %v452
  %892 = vmatpush.msra.mxu0 %v436
  %893 = vmatmul.f32.gmra.mxu0 %v518
  %v894 = vpop.f32.mrf.mxu0
  %v895 = vadd.f32 %v499, %v894
  %896 = vmatmul.f32.gmra.mxu0 %v521
  %v897 = vpop.f32.mrf.mxu0
  %v898 = vadd.f32 %v504, %v897
  %899 = vmatmul.f32.gmra.mxu0 %v524
  %v900 = vpop.f32.mrf.mxu0
  %v901 = vadd.f32 %v509, %v900
  %902 = vmatmul.f32.gmra.mxu0 %v527
  %v903 = vpop.f32.mrf.mxu0
  %v904 = vadd.f32 %v514, %v903
  %905 = vdwg.mxu0
  %906 = vmatpush.msra.mxu0 0.0
  %907 = vmatpush.msra.mxu0 0.0
  %908 = vmatpush.msra.mxu0 0.0
  %909 = vmatpush.msra.mxu0 0.0
  %910 = vmatpush.msra.mxu0 0.0
  %911 = vmatpush.msra.mxu0 0.0
  %912 = vmatpush.msra.mxu0 0.0
  %913 = vmatpush.msra.mxu0 0.0
  %914 = vmatpush.msra.mxu0 0.0
  %915 = vmatpush.msra.mxu0 0.0
  %916 = vmatpush.msra.mxu0 0.0
  %917 = vmatpush.msra.mxu0 0.0
  %918 = vmatpush.msra.mxu0 %v485
  %919 = vmatpush.msra.mxu0 %v469
  %920 = vmatpush.msra.mxu0 %v453
  %921 = vmatpush.msra.mxu0 %v437
  %922 = vmatmul.f32.gmra.mxu0 %v518
  %v923 = vpop.f32.mrf.mxu0
  %v924 = vadd.f32 %v499, %v923
  %925 = vmatmul.f32.gmra.mxu0 %v521
  %v926 = vpop.f32.mrf.mxu0
  %v927 = vadd.f32 %v504, %v926
  %928 = vmatmul.f32.gmra.mxu0 %v524
  %v929 = vpop.f32.mrf.mxu0
  %v930 = vadd.f32 %v509, %v929
  %931 = vmatmul.f32.gmra.mxu0 %v527
  %v932 = vpop.f32.mrf.mxu0
  %v933 = vadd.f32 %v514, %v932
  %934 = vdwg.mxu0
  %935 = vmatpush.msra.mxu0 0.0
  %936 = vmatpush.msra.mxu0 0.0
  %937 = vmatpush.msra.mxu0 0.0
  %938 = vmatpush.msra.mxu0 0.0
  %939 = vmatpush.msra.mxu0 0.0
  %940 = vmatpush.msra.mxu0 0.0
  %941 = vmatpush.msra.mxu0 0.0
  %942 = vmatpush.msra.mxu0 0.0
  %943 = vmatpush.msra.mxu0 0.0
  %944 = vmatpush.msra.mxu0 0.0
  %945 = vmatpush.msra.mxu0 0.0
  %946 = vmatpush.msra.mxu0 0.0
  %947 = vmatpush.msra.mxu0 %v486
  %948 = vmatpush.msra.mxu0 %v470
  %949 = vmatpush.msra.mxu0 %v454
  %950 = vmatpush.msra.mxu0 %v438
  %951 = vmatmul.f32.gmra.mxu0 %v518
  %v952 = vpop.f32.mrf.mxu0
  %v953 = vadd.f32 %v499, %v952
  %954 = vmatmul.f32.gmra.mxu0 %v521
  %v955 = vpop.f32.mrf.mxu0
  %v956 = vadd.f32 %v504, %v955
  %957 = vmatmul.f32.gmra.mxu0 %v524
  %v958 = vpop.f32.mrf.mxu0
  %v959 = vadd.f32 %v509, %v958
  %960 = vmatmul.f32.gmra.mxu0 %v527
  %v961 = vpop.f32.mrf.mxu0
  %v962 = vadd.f32 %v514, %v961
  %963 = vdwg.mxu0
  %964 = vmatpush.msra.mxu0 0.0
  %965 = vmatpush.msra.mxu0 0.0
  %966 = vmatpush.msra.mxu0 0.0
  %967 = vmatpush.msra.mxu0 0.0
  %968 = vmatpush.msra.mxu0 0.0
  %969 = vmatpush.msra.mxu0 0.0
  %970 = vmatpush.msra.mxu0 0.0
  %971 = vmatpush.msra.mxu0 0.0
  %972 = vmatpush.msra.mxu0 0.0
  %973 = vmatpush.msra.mxu0 0.0
  %974 = vmatpush.msra.mxu0 0.0
  %975 = vmatpush.msra.mxu0 0.0
  %976 = vmatpush.msra.mxu0 %v487
  %977 = vmatpush.msra.mxu0 %v471
  %978 = vmatpush.msra.mxu0 %v455
  %979 = vmatpush.msra.mxu0 %v439
  %980 = vmatmul.f32.gmra.mxu0 %v518
  %v981 = vpop.f32.mrf.mxu0
  %v982 = vadd.f32 %v499, %v981
  %983 = vmatmul.f32.gmra.mxu0 %v521
  %v984 = vpop.f32.mrf.mxu0
  %v985 = vadd.f32 %v504, %v984
  %986 = vmatmul.f32.gmra.mxu0 %v524
  %v987 = vpop.f32.mrf.mxu0
  %v988 = vadd.f32 %v509, %v987
  %989 = vmatmul.f32.gmra.mxu0 %v527
  %v990 = vpop.f32.mrf.mxu0
  %v991 = vadd.f32 %v514, %v990
  %992 = vdwg.mxu0
  %v993 = vtanh.pop %v547
  %v994 = vtanh.pop %v576
  %v995 = vtanh.pop %v605
  %v996 = vtanh.pop %v634
  %v997 = vtanh.pop %v663
  %v998 = vtanh.pop %v692
  %v999 = vtanh.pop %v721
  %v1000 = vtanh.pop %v750
  %v1001 = vtanh.pop %v779
  %v1002 = vtanh.pop %v808
  %v1003 = vtanh.pop %v837
  %v1004 = vtanh.pop %v866
  %v1005 = vtanh.pop %v895
  %v1006 = vtanh.pop %v924
  %v1007 = vtanh.pop %v953
  %v1008 = vtanh.pop %v982
  %v1009 = vtanh.pop %v550
  %v1010 = vtanh.pop %v579
  %v1011 = vtanh.pop %v608
  %v1012 = vtanh.pop %v637
  %v1013 = vtanh.pop %v666
  %v1014 = vtanh.pop %v695
  %v1015 = vtanh.pop %v724
  %v1016 = vtanh.pop %v753
  %v1017 = vtanh.pop %v782
  %v1018 = vtanh.pop %v811
  %v1019 = vtanh.pop %v840
  %v1020 = vtanh.pop %v869
  %v1021 = vtanh.pop %v898
  %v1022 = vtanh.pop %v927
  %v1023 = vtanh.pop %v956
  %v1024 = vtanh.pop %v985
  %v1025 = vtanh.pop %v553
  %v1026 = vtanh.pop %v582
  %v1027 = vtanh.pop %v611
  %v1028 = vtanh.pop %v640
  %v1029 = vtanh.pop %v669
  %v1030 = vtanh.pop %v698
  %v1031 = vtanh.pop %v727
  %v1032 = vtanh.pop %v756
  %v1033 = vtanh.pop %v785
  %v1034 = vtanh.pop %v814
  %v1035 = vtanh.pop %v843
  %v1036 = vtanh.pop %v872
  %v1037 = vtanh.pop %v901
  %v1038 = vtanh.pop %v930
  %v1039 = vtanh.pop %v959
  %v1040 = vtanh.pop %v988
  %v1041 = vtanh.pop %v556
  %v1042 = vtanh.pop %v585
  %v1043 = vtanh.pop %v614
  %v1044 = vtanh.pop %v643
  %v1045 = vtanh.pop %v672
  %v1046 = vtanh.pop %v701
  %v1047 = vtanh.pop %v730
  %v1048 = vtanh.pop %v759
  %v1049 = vtanh.pop %v788
  %v1050 = vtanh.pop %v817
  %v1051 = vtanh.pop %v846
  %v1052 = vtanh.pop %v875
  %v1053 = vtanh.pop %v904
  %v1054 = vtanh.pop %v933
  %v1055 = vtanh.pop %v962
  %v1056 = vtanh.pop %v991
  %s1057 = scalar_lea.vmem %s3, 32
  %v1058 = vld [vmem:[%s1057] sm:$0xff]
  %v1059 = vld [vmem:[%s1057 + $0x8] sm:$0xff]
  %v1060 = vld [vmem:[%s1057 + $0x10] sm:$0xff]
  %v1061 = vld [vmem:[%s1057 + $0x18] sm:$0xff]
  %s1062 = scalar_lea.vmem %s4, 32
  %v1063 = vld [vmem:[%s1062] sm:$0xff]
  %v1064 = vld [vmem:[%s1062 + $0x8] sm:$0xff]
  %v1065 = vld [vmem:[%s1062 + $0x10] sm:$0xff]
  %v1066 = vld [vmem:[%s1062 + $0x18] sm:$0xff]
  %1068 = vset.pattern.permute.xlu0 0
  %1069 = vperm.xlu0 %1068, %v1063
  %v1070 = vpop.permute.xlu0 %1069
  %1073 = vset.pattern.permute.xlu0 0
  %1074 = vperm.xlu0 %1073, %v1064
  %v1075 = vpop.permute.xlu0 %1074
  %1078 = vset.pattern.permute.xlu0 0
  %1079 = vperm.xlu0 %1078, %v1065
  %v1080 = vpop.permute.xlu0 %1079
  %1083 = vset.pattern.permute.xlu0 0
  %1084 = vperm.xlu0 %1083, %v1066
  %v1085 = vpop.permute.xlu0 %1084
  %v1088 = vsel %vm516, %v1058, 0
  %v1091 = vsel %vm516, %v1059, 0
  %v1094 = vsel %vm516, %v1060, 0
  %v1097 = vsel %vm516, %v1061, 0
  %1099 = vmatpush.msra.mxu0 0.0
  %1100 = vmatpush.msra.mxu0 0.0
  %1101 = vmatpush.msra.mxu0 0.0
  %1102 = vmatpush.msra.mxu0 0.0
  %1103 = vmatpush.msra.mxu0 0.0
  %1104 = vmatpush.msra.mxu0 0.0
  %1105 = vmatpush.msra.mxu0 0.0
  %1106 = vmatpush.msra.mxu0 0.0
  %1107 = vmatpush.msra.mxu0 0.0
  %1108 = vmatpush.msra.mxu0 0.0
  %1109 = vmatpush.msra.mxu0 0.0
  %1110 = vmatpush.msra.mxu0 0.0
  %1111 = vmatpush.msra.mxu0 %v1041
  %1112 = vmatpush.msra.mxu0 %v1025
  %1113 = vmatpush.msra.mxu0 %v1009
  %1114 = vmatpush.msra.mxu0 %v993
  %1115 = vmatmul.f32.gmra.mxu0 %v1088
  %v1116 = vpop.f32.mrf.mxu0
  %v1117 = vadd.f32 %v1070, %v1116
  %1118 = vmatmul.f32.gmra.mxu0 %v1091
  %v1119 = vpop.f32.mrf.mxu0
  %v1120 = vadd.f32 %v1075, %v1119
  %1121 = vmatmul.f32.gmra.mxu0 %v1094
  %v1122 = vpop.f32.mrf.mxu0
  %v1123 = vadd.f32 %v1080, %v1122
  %1124 = vmatmul.f32.gmra.mxu0 %v1097
  %v1125 = vpop.f32.mrf.mxu0
  %v1126 = vadd.f32 %v1085, %v1125
  %1127 = vdwg.mxu0
  %1128 = vmatpush.msra.mxu0 0.0
  %1129 = vmatpush.msra.mxu0 0.0
  %1130 = vmatpush.msra.mxu0 0.0
  %1131 = vmatpush.msra.mxu0 0.0
  %1132 = vmatpush.msra.mxu0 0.0
  %1133 = vmatpush.msra.mxu0 0.0
  %1134 = vmatpush.msra.mxu0 0.0
  %1135 = vmatpush.msra.mxu0 0.0
  %1136 = vmatpush.msra.mxu0 0.0
  %1137 = vmatpush.msra.mxu0 0.0
  %1138 = vmatpush.msra.mxu0 0.0
  %1139 = vmatpush.msra.mxu0 0.0
  %1140 = vmatpush.msra.mxu0 %v1042
  %1141 = vmatpush.msra.mxu0 %v1026
  %1142 = vmatpush.msra.mxu0 %v1010
  %1143 = vmatpush.msra.mxu0 %v994
  %1144 = vmatmul.f32.gmra.mxu0 %v1088
  %v1145 = vpop.f32.mrf.mxu0
  %v1146 = vadd.f32 %v1070, %v1145
  %1147 = vmatmul.f32.gmra.mxu0 %v1091
  %v1148 = vpop.f32.mrf.mxu0
  %v1149 = vadd.f32 %v1075, %v1148
  %1150 = vmatmul.f32.gmra.mxu0 %v1094
  %v1151 = vpop.f32.mrf.mxu0
  %v1152 = vadd.f32 %v1080, %v1151
  %1153 = vmatmul.f32.gmra.mxu0 %v1097
  %v1154 = vpop.f32.mrf.mxu0
  %v1155 = vadd.f32 %v1085, %v1154
  %1156 = vdwg.mxu0
  %1157 = vmatpush.msra.mxu0 0.0
  %1158 = vmatpush.msra.mxu0 0.0
  %1159 = vmatpush.msra.mxu0 0.0
  %1160 = vmatpush.msra.mxu0 0.0
  %1161 = vmatpush.msra.mxu0 0.0
  %1162 = vmatpush.msra.mxu0 0.0
  %1163 = vmatpush.msra.mxu0 0.0
  %1164 = vmatpush.msra.mxu0 0.0
  %1165 = vmatpush.msra.mxu0 0.0
  %1166 = vmatpush.msra.mxu0 0.0
  %1167 = vmatpush.msra.mxu0 0.0
  %1168 = vmatpush.msra.mxu0 0.0
  %1169 = vmatpush.msra.mxu0 %v1043
  %1170 = vmatpush.msra.mxu0 %v1027
  %1171 = vmatpush.msra.mxu0 %v1011
  %1172 = vmatpush.msra.mxu0 %v995
  %1173 = vmatmul.f32.gmra.mxu0 %v1088
  %v1174 = vpop.f32.mrf.mxu0
  %v1175 = vadd.f32 %v1070, %v1174
  %1176 = vmatmul.f32.gmra.mxu0 %v1091
  %v1177 = vpop.f32.mrf.mxu0
  %v1178 = vadd.f32 %v1075, %v1177
  %1179 = vmatmul.f32.gmra.mxu0 %v1094
  %v1180 = vpop.f32.mrf.mxu0
  %v1181 = vadd.f32 %v1080, %v1180
  %1182 = vmatmul.f32.gmra.mxu0 %v1097
  %v1183 = vpop.f32.mrf.mxu0
  %v1184 = vadd.f32 %v1085, %v1183
  %1185 = vdwg.mxu0
  %1186 = vmatpush.msra.mxu0 0.0
  %1187 = vmatpush.msra.mxu0 0.0
  %1188 = vmatpush.msra.mxu0 0.0
  %1189 = vmatpush.msra.mxu0 0.0
  %1190 = vmatpush.msra.mxu0 0.0
  %1191 = vmatpush.msra.mxu0 0.0
  %1192 = vmatpush.msra.mxu0 0.0
  %1193 = vmatpush.msra.mxu0 0.0
  %1194 = vmatpush.msra.mxu0 0.0
  %1195 = vmatpush.msra.mxu0 0.0
  %1196 = vmatpush.msra.mxu0 0.0
  %1197 = vmatpush.msra.mxu0 0.0
  %1198 = vmatpush.msra.mxu0 %v1044
  %1199 = vmatpush.msra.mxu0 %v1028
  %1200 = vmatpush.msra.mxu0 %v1012
  %1201 = vmatpush.msra.mxu0 %v996
  %1202 = vmatmul.f32.gmra.mxu0 %v1088
  %v1203 = vpop.f32.mrf.mxu0
  %v1204 = vadd.f32 %v1070, %v1203
  %1205 = vmatmul.f32.gmra.mxu0 %v1091
  %v1206 = vpop.f32.mrf.mxu0
  %v1207 = vadd.f32 %v1075, %v1206
  %1208 = vmatmul.f32.gmra.mxu0 %v1094
  %v1209 = vpop.f32.mrf.mxu0
  %v1210 = vadd.f32 %v1080, %v1209
  %1211 = vmatmul.f32.gmra.mxu0 %v1097
  %v1212 = vpop.f32.mrf.mxu0
  %v1213 = vadd.f32 %v1085, %v1212
  %1214 = vdwg.mxu0
  %1215 = vmatpush.msra.mxu0 0.0
  %1216 = vmatpush.msra.mxu0 0.0
  %1217 = vmatpush.msra.mxu0 0.0
  %1218 = vmatpush.msra.mxu0 0.0
  %1219 = vmatpush.msra.mxu0 0.0
  %1220 = vmatpush.msra.mxu0 0.0
  %1221 = vmatpush.msra.mxu0 0.0
  %1222 = vmatpush.msra.mxu0 0.0
  %1223 = vmatpush.msra.mxu0 0.0
  %1224 = vmatpush.msra.mxu0 0.0
  %1225 = vmatpush.msra.mxu0 0.0
  %1226 = vmatpush.msra.mxu0 0.0
  %1227 = vmatpush.msra.mxu0 %v1045
  %1228 = vmatpush.msra.mxu0 %v1029
  %1229 = vmatpush.msra.mxu0 %v1013
  %1230 = vmatpush.msra.mxu0 %v997
  %1231 = vmatmul.f32.gmra.mxu0 %v1088
  %v1232 = vpop.f32.mrf.mxu0
  %v1233 = vadd.f32 %v1070, %v1232
  %1234 = vmatmul.f32.gmra.mxu0 %v1091
  %v1235 = vpop.f32.mrf.mxu0
  %v1236 = vadd.f32 %v1075, %v1235
  %1237 = vmatmul.f32.gmra.mxu0 %v1094
  %v1238 = vpop.f32.mrf.mxu0
  %v1239 = vadd.f32 %v1080, %v1238
  %1240 = vmatmul.f32.gmra.mxu0 %v1097
  %v1241 = vpop.f32.mrf.mxu0
  %v1242 = vadd.f32 %v1085, %v1241
  %1243 = vdwg.mxu0
  %1244 = vmatpush.msra.mxu0 0.0
  %1245 = vmatpush.msra.mxu0 0.0
  %1246 = vmatpush.msra.mxu0 0.0
  %1247 = vmatpush.msra.mxu0 0.0
  %1248 = vmatpush.msra.mxu0 0.0
  %1249 = vmatpush.msra.mxu0 0.0
  %1250 = vmatpush.msra.mxu0 0.0
  %1251 = vmatpush.msra.mxu0 0.0
  %1252 = vmatpush.msra.mxu0 0.0
  %1253 = vmatpush.msra.mxu0 0.0
  %1254 = vmatpush.msra.mxu0 0.0
  %1255 = vmatpush.msra.mxu0 0.0
  %1256 = vmatpush.msra.mxu0 %v1046
  %1257 = vmatpush.msra.mxu0 %v1030
  %1258 = vmatpush.msra.mxu0 %v1014
  %1259 = vmatpush.msra.mxu0 %v998
  %1260 = vmatmul.f32.gmra.mxu0 %v1088
  %v1261 = vpop.f32.mrf.mxu0
  %v1262 = vadd.f32 %v1070, %v1261
  %1263 = vmatmul.f32.gmra.mxu0 %v1091
  %v1264 = vpop.f32.mrf.mxu0
  %v1265 = vadd.f32 %v1075, %v1264
  %1266 = vmatmul.f32.gmra.mxu0 %v1094
  %v1267 = vpop.f32.mrf.mxu0
  %v1268 = vadd.f32 %v1080, %v1267
  %1269 = vmatmul.f32.gmra.mxu0 %v1097
  %v1270 = vpop.f32.mrf.mxu0
  %v1271 = vadd.f32 %v1085, %v1270
  %1272 = vdwg.mxu0
  %1273 = vmatpush.msra.mxu0 0.0
  %1274 = vmatpush.msra.mxu0 0.0
  %1275 = vmatpush.msra.mxu0 0.0
  %1276 = vmatpush.msra.mxu0 0.0
  %1277 = vmatpush.msra.mxu0 0.0
  %1278 = vmatpush.msra.mxu0 0.0
  %1279 = vmatpush.msra.mxu0 0.0
  %1280 = vmatpush.msra.mxu0 0.0
  %1281 = vmatpush.msra.mxu0 0.0
  %1282 = vmatpush.msra.mxu0 0.0
  %1283 = vmatpush.msra.mxu0 0.0
  %1284 = vmatpush.msra.mxu0 0.0
  %1285 = vmatpush.msra.mxu0 %v1047
  %1286 = vmatpush.msra.mxu0 %v1031
  %1287 = vmatpush.msra.mxu0 %v1015
  %1288 = vmatpush.msra.mxu0 %v999
  %1289 = vmatmul.f32.gmra.mxu0 %v1088
  %v1290 = vpop.f32.mrf.mxu0
  %v1291 = vadd.f32 %v1070, %v1290
  %1292 = vmatmul.f32.gmra.mxu0 %v1091
  %v1293 = vpop.f32.mrf.mxu0
  %v1294 = vadd.f32 %v1075, %v1293
  %1295 = vmatmul.f32.gmra.mxu0 %v1094
  %v1296 = vpop.f32.mrf.mxu0
  %v1297 = vadd.f32 %v1080, %v1296
  %1298 = vmatmul.f32.gmra.mxu0 %v1097
  %v1299 = vpop.f32.mrf.mxu0
  %v1300 = vadd.f32 %v1085, %v1299
  %1301 = vdwg.mxu0
  %1302 = vmatpush.msra.mxu0 0.0
  %1303 = vmatpush.msra.mxu0 0.0
  %1304 = vmatpush.msra.mxu0 0.0
  %1305 = vmatpush.msra.mxu0 0.0
  %1306 = vmatpush.msra.mxu0 0.0
  %1307 = vmatpush.msra.mxu0 0.0
  %1308 = vmatpush.msra.mxu0 0.0
  %1309 = vmatpush.msra.mxu0 0.0
  %1310 = vmatpush.msra.mxu0 0.0
  %1311 = vmatpush.msra.mxu0 0.0
  %1312 = vmatpush.msra.mxu0 0.0
  %1313 = vmatpush.msra.mxu0 0.0
  %1314 = vmatpush.msra.mxu0 %v1048
  %1315 = vmatpush.msra.mxu0 %v1032
  %1316 = vmatpush.msra.mxu0 %v1016
  %1317 = vmatpush.msra.mxu0 %v1000
  %1318 = vmatmul.f32.gmra.mxu0 %v1088
  %v1319 = vpop.f32.mrf.mxu0
  %v1320 = vadd.f32 %v1070, %v1319
  %1321 = vmatmul.f32.gmra.mxu0 %v1091
  %v1322 = vpop.f32.mrf.mxu0
  %v1323 = vadd.f32 %v1075, %v1322
  %1324 = vmatmul.f32.gmra.mxu0 %v1094
  %v1325 = vpop.f32.mrf.mxu0
  %v1326 = vadd.f32 %v1080, %v1325
  %1327 = vmatmul.f32.gmra.mxu0 %v1097
  %v1328 = vpop.f32.mrf.mxu0
  %v1329 = vadd.f32 %v1085, %v1328
  %1330 = vdwg.mxu0
  %1331 = vmatpush.msra.mxu0 0.0
  %1332 = vmatpush.msra.mxu0 0.0
  %1333 = vmatpush.msra.mxu0 0.0
  %1334 = vmatpush.msra.mxu0 0.0
  %1335 = vmatpush.msra.mxu0 0.0
  %1336 = vmatpush.msra.mxu0 0.0
  %1337 = vmatpush.msra.mxu0 0.0
  %1338 = vmatpush.msra.mxu0 0.0
  %1339 = vmatpush.msra.mxu0 0.0
  %1340 = vmatpush.msra.mxu0 0.0
  %1341 = vmatpush.msra.mxu0 0.0
  %1342 = vmatpush.msra.mxu0 0.0
  %1343 = vmatpush.msra.mxu0 %v1049
  %1344 = vmatpush.msra.mxu0 %v1033
  %1345 = vmatpush.msra.mxu0 %v1017
  %1346 = vmatpush.msra.mxu0 %v1001
  %1347 = vmatmul.f32.gmra.mxu0 %v1088
  %v1348 = vpop.f32.mrf.mxu0
  %v1349 = vadd.f32 %v1070, %v1348
  %1350 = vmatmul.f32.gmra.mxu0 %v1091
  %v1351 = vpop.f32.mrf.mxu0
  %v1352 = vadd.f32 %v1075, %v1351
  %1353 = vmatmul.f32.gmra.mxu0 %v1094
  %v1354 = vpop.f32.mrf.mxu0
  %v1355 = vadd.f32 %v1080, %v1354
  %1356 = vmatmul.f32.gmra.mxu0 %v1097
  %v1357 = vpop.f32.mrf.mxu0
  %v1358 = vadd.f32 %v1085, %v1357
  %1359 = vdwg.mxu0
  %1360 = vmatpush.msra.mxu0 0.0
  %1361 = vmatpush.msra.mxu0 0.0
  %1362 = vmatpush.msra.mxu0 0.0
  %1363 = vmatpush.msra.mxu0 0.0
  %1364 = vmatpush.msra.mxu0 0.0
  %1365 = vmatpush.msra.mxu0 0.0
  %1366 = vmatpush.msra.mxu0 0.0
  %1367 = vmatpush.msra.mxu0 0.0
  %1368 = vmatpush.msra.mxu0 0.0
  %1369 = vmatpush.msra.mxu0 0.0
  %1370 = vmatpush.msra.mxu0 0.0
  %1371 = vmatpush.msra.mxu0 0.0
  %1372 = vmatpush.msra.mxu0 %v1050
  %1373 = vmatpush.msra.mxu0 %v1034
  %1374 = vmatpush.msra.mxu0 %v1018
  %1375 = vmatpush.msra.mxu0 %v1002
  %1376 = vmatmul.f32.gmra.mxu0 %v1088
  %v1377 = vpop.f32.mrf.mxu0
  %v1378 = vadd.f32 %v1070, %v1377
  %1379 = vmatmul.f32.gmra.mxu0 %v1091
  %v1380 = vpop.f32.mrf.mxu0
  %v1381 = vadd.f32 %v1075, %v1380
  %1382 = vmatmul.f32.gmra.mxu0 %v1094
  %v1383 = vpop.f32.mrf.mxu0
  %v1384 = vadd.f32 %v1080, %v1383
  %1385 = vmatmul.f32.gmra.mxu0 %v1097
  %v1386 = vpop.f32.mrf.mxu0
  %v1387 = vadd.f32 %v1085, %v1386
  %1388 = vdwg.mxu0
  %1389 = vmatpush.msra.mxu0 0.0
  %1390 = vmatpush.msra.mxu0 0.0
  %1391 = vmatpush.msra.mxu0 0.0
  %1392 = vmatpush.msra.mxu0 0.0
  %1393 = vmatpush.msra.mxu0 0.0
  %1394 = vmatpush.msra.mxu0 0.0
  %1395 = vmatpush.msra.mxu0 0.0
  %1396 = vmatpush.msra.mxu0 0.0
  %1397 = vmatpush.msra.mxu0 0.0
  %1398 = vmatpush.msra.mxu0 0.0
  %1399 = vmatpush.msra.mxu0 0.0
  %1400 = vmatpush.msra.mxu0 0.0
  %1401 = vmatpush.msra.mxu0 %v1051
  %1402 = vmatpush.msra.mxu0 %v1035
  %1403 = vmatpush.msra.mxu0 %v1019
  %1404 = vmatpush.msra.mxu0 %v1003
  %1405 = vmatmul.f32.gmra.mxu0 %v1088
  %v1406 = vpop.f32.mrf.mxu0
  %v1407 = vadd.f32 %v1070, %v1406
  %1408 = vmatmul.f32.gmra.mxu0 %v1091
  %v1409 = vpop.f32.mrf.mxu0
  %v1410 = vadd.f32 %v1075, %v1409
  %1411 = vmatmul.f32.gmra.mxu0 %v1094
  %v1412 = vpop.f32.mrf.mxu0
  %v1413 = vadd.f32 %v1080, %v1412
  %1414 = vmatmul.f32.gmra.mxu0 %v1097
  %v1415 = vpop.f32.mrf.mxu0
  %v1416 = vadd.f32 %v1085, %v1415
  %1417 = vdwg.mxu0
  %1418 = vmatpush.msra.mxu0 0.0
  %1419 = vmatpush.msra.mxu0 0.0
  %1420 = vmatpush.msra.mxu0 0.0
  %1421 = vmatpush.msra.mxu0 0.0
  %1422 = vmatpush.msra.mxu0 0.0
  %1423 = vmatpush.msra.mxu0 0.0
  %1424 = vmatpush.msra.mxu0 0.0
  %1425 = vmatpush.msra.mxu0 0.0
  %1426 = vmatpush.msra.mxu0 0.0
  %1427 = vmatpush.msra.mxu0 0.0
  %1428 = vmatpush.msra.mxu0 0.0
  %1429 = vmatpush.msra.mxu0 0.0
  %1430 = vmatpush.msra.mxu0 %v1052
  %1431 = vmatpush.msra.mxu0 %v1036
  %1432 = vmatpush.msra.mxu0 %v1020
  %1433 = vmatpush.msra.mxu0 %v1004
  %1434 = vmatmul.f32.gmra.mxu0 %v1088
  %v1435 = vpop.f32.mrf.mxu0
  %v1436 = vadd.f32 %v1070, %v1435
  %1437 = vmatmul.f32.gmra.mxu0 %v1091
  %v1438 = vpop.f32.mrf.mxu0
  %v1439 = vadd.f32 %v1075, %v1438
  %1440 = vmatmul.f32.gmra.mxu0 %v1094
  %v1441 = vpop.f32.mrf.mxu0
  %v1442 = vadd.f32 %v1080, %v1441
  %1443 = vmatmul.f32.gmra.mxu0 %v1097
  %v1444 = vpop.f32.mrf.mxu0
  %v1445 = vadd.f32 %v1085, %v1444
  %1446 = vdwg.mxu0
  %1447 = vmatpush.msra.mxu0 0.0
  %1448 = vmatpush.msra.mxu0 0.0
  %1449 = vmatpush.msra.mxu0 0.0
  %1450 = vmatpush.msra.mxu0 0.0
  %1451 = vmatpush.msra.mxu0 0.0
  %1452 = vmatpush.msra.mxu0 0.0
  %1453 = vmatpush.msra.mxu0 0.0
  %1454 = vmatpush.msra.mxu0 0.0
  %1455 = vmatpush.msra.mxu0 0.0
  %1456 = vmatpush.msra.mxu0 0.0
  %1457 = vmatpush.msra.mxu0 0.0
  %1458 = vmatpush.msra.mxu0 0.0
  %1459 = vmatpush.msra.mxu0 %v1053
  %1460 = vmatpush.msra.mxu0 %v1037
  %1461 = vmatpush.msra.mxu0 %v1021
  %1462 = vmatpush.msra.mxu0 %v1005
  %1463 = vmatmul.f32.gmra.mxu0 %v1088
  %v1464 = vpop.f32.mrf.mxu0
  %v1465 = vadd.f32 %v1070, %v1464
  %1466 = vmatmul.f32.gmra.mxu0 %v1091
  %v1467 = vpop.f32.mrf.mxu0
  %v1468 = vadd.f32 %v1075, %v1467
  %1469 = vmatmul.f32.gmra.mxu0 %v1094
  %v1470 = vpop.f32.mrf.mxu0
  %v1471 = vadd.f32 %v1080, %v1470
  %1472 = vmatmul.f32.gmra.mxu0 %v1097
  %v1473 = vpop.f32.mrf.mxu0
  %v1474 = vadd.f32 %v1085, %v1473
  %1475 = vdwg.mxu0
  %1476 = vmatpush.msra.mxu0 0.0
  %1477 = vmatpush.msra.mxu0 0.0
  %1478 = vmatpush.msra.mxu0 0.0
  %1479 = vmatpush.msra.mxu0 0.0
  %1480 = vmatpush.msra.mxu0 0.0
  %1481 = vmatpush.msra.mxu0 0.0
  %1482 = vmatpush.msra.mxu0 0.0
  %1483 = vmatpush.msra.mxu0 0.0
  %1484 = vmatpush.msra.mxu0 0.0
  %1485 = vmatpush.msra.mxu0 0.0
  %1486 = vmatpush.msra.mxu0 0.0
  %1487 = vmatpush.msra.mxu0 0.0
  %1488 = vmatpush.msra.mxu0 %v1054
  %1489 = vmatpush.msra.mxu0 %v1038
  %1490 = vmatpush.msra.mxu0 %v1022
  %1491 = vmatpush.msra.mxu0 %v1006
  %1492 = vmatmul.f32.gmra.mxu0 %v1088
  %v1493 = vpop.f32.mrf.mxu0
  %v1494 = vadd.f32 %v1070, %v1493
  %1495 = vmatmul.f32.gmra.mxu0 %v1091
  %v1496 = vpop.f32.mrf.mxu0
  %v1497 = vadd.f32 %v1075, %v1496
  %1498 = vmatmul.f32.gmra.mxu0 %v1094
  %v1499 = vpop.f32.mrf.mxu0
  %v1500 = vadd.f32 %v1080, %v1499
  %1501 = vmatmul.f32.gmra.mxu0 %v1097
  %v1502 = vpop.f32.mrf.mxu0
  %v1503 = vadd.f32 %v1085, %v1502
  %1504 = vdwg.mxu0
  %1505 = vmatpush.msra.mxu0 0.0
  %1506 = vmatpush.msra.mxu0 0.0
  %1507 = vmatpush.msra.mxu0 0.0
  %1508 = vmatpush.msra.mxu0 0.0
  %1509 = vmatpush.msra.mxu0 0.0
  %1510 = vmatpush.msra.mxu0 0.0
  %1511 = vmatpush.msra.mxu0 0.0
  %1512 = vmatpush.msra.mxu0 0.0
  %1513 = vmatpush.msra.mxu0 0.0
  %1514 = vmatpush.msra.mxu0 0.0
  %1515 = vmatpush.msra.mxu0 0.0
  %1516 = vmatpush.msra.mxu0 0.0
  %1517 = vmatpush.msra.mxu0 %v1055
  %1518 = vmatpush.msra.mxu0 %v1039
  %1519 = vmatpush.msra.mxu0 %v1023
  %1520 = vmatpush.msra.mxu0 %v1007
  %1521 = vmatmul.f32.gmra.mxu0 %v1088
  %v1522 = vpop.f32.mrf.mxu0
  %v1523 = vadd.f32 %v1070, %v1522
  %1524 = vmatmul.f32.gmra.mxu0 %v1091
  %v1525 = vpop.f32.mrf.mxu0
  %v1526 = vadd.f32 %v1075, %v1525
  %1527 = vmatmul.f32.gmra.mxu0 %v1094
  %v1528 = vpop.f32.mrf.mxu0
  %v1529 = vadd.f32 %v1080, %v1528
  %1530 = vmatmul.f32.gmra.mxu0 %v1097
  %v1531 = vpop.f32.mrf.mxu0
  %v1532 = vadd.f32 %v1085, %v1531
  %1533 = vdwg.mxu0
  %1534 = vmatpush.msra.mxu0 0.0
  %1535 = vmatpush.msra.mxu0 0.0
  %1536 = vmatpush.msra.mxu0 0.0
  %1537 = vmatpush.msra.mxu0 0.0
  %1538 = vmatpush.msra.mxu0 0.0
  %1539 = vmatpush.msra.mxu0 0.0
  %1540 = vmatpush.msra.mxu0 0.0
  %1541 = vmatpush.msra.mxu0 0.0
  %1542 = vmatpush.msra.mxu0 0.0
  %1543 = vmatpush.msra.mxu0 0.0
  %1544 = vmatpush.msra.mxu0 0.0
  %1545 = vmatpush.msra.mxu0 0.0
  %1546 = vmatpush.msra.mxu0 %v1056
  %1547 = vmatpush.msra.mxu0 %v1040
  %1548 = vmatpush.msra.mxu0 %v1024
  %1549 = vmatpush.msra.mxu0 %v1008
  %1550 = vmatmul.f32.gmra.mxu0 %v1088
  %v1551 = vpop.f32.mrf.mxu0
  %v1552 = vadd.f32 %v1070, %v1551
  %1553 = vmatmul.f32.gmra.mxu0 %v1091
  %v1554 = vpop.f32.mrf.mxu0
  %v1555 = vadd.f32 %v1075, %v1554
  %1556 = vmatmul.f32.gmra.mxu0 %v1094
  %v1557 = vpop.f32.mrf.mxu0
  %v1558 = vadd.f32 %v1080, %v1557
  %1559 = vmatmul.f32.gmra.mxu0 %v1097
  %v1560 = vpop.f32.mrf.mxu0
  %v1561 = vadd.f32 %v1085, %v1560
  %1562 = vdwg.mxu0
  %v1563 = vtanh.pop %v1117
  %v1564 = vtanh.pop %v1146
  %v1565 = vtanh.pop %v1175
  %v1566 = vtanh.pop %v1204
  %v1567 = vtanh.pop %v1233
  %v1568 = vtanh.pop %v1262
  %v1569 = vtanh.pop %v1291
  %v1570 = vtanh.pop %v1320
  %v1571 = vtanh.pop %v1349
  %v1572 = vtanh.pop %v1378
  %v1573 = vtanh.pop %v1407
  %v1574 = vtanh.pop %v1436
  %v1575 = vtanh.pop %v1465
  %v1576 = vtanh.pop %v1494
  %v1577 = vtanh.pop %v1523
  %v1578 = vtanh.pop %v1552
  %v1579 = vtanh.pop %v1120
  %v1580 = vtanh.pop %v1149
  %v1581 = vtanh.pop %v1178
  %v1582 = vtanh.pop %v1207
  %v1583 = vtanh.pop %v1236
  %v1584 = vtanh.pop %v1265
  %v1585 = vtanh.pop %v1294
  %v1586 = vtanh.pop %v1323
  %v1587 = vtanh.pop %v1352
  %v1588 = vtanh.pop %v1381
  %v1589 = vtanh.pop %v1410
  %v1590 = vtanh.pop %v1439
  %v1591 = vtanh.pop %v1468
  %v1592 = vtanh.pop %v1497
  %v1593 = vtanh.pop %v1526
  %v1594 = vtanh.pop %v1555
  %v1595 = vtanh.pop %v1123
  %v1596 = vtanh.pop %v1152
  %v1597 = vtanh.pop %v1181
  %v1598 = vtanh.pop %v1210
  %v1599 = vtanh.pop %v1239
  %v1600 = vtanh.pop %v1268
  %v1601 = vtanh.pop %v1297
  %v1602 = vtanh.pop %v1326
  %v1603 = vtanh.pop %v1355
  %v1604 = vtanh.pop %v1384
  %v1605 = vtanh.pop %v1413
  %v1606 = vtanh.pop %v1442
  %v1607 = vtanh.pop %v1471
  %v1608 = vtanh.pop %v1500
  %v1609 = vtanh.pop %v1529
  %v1610 = vtanh.pop %v1558
  %v1611 = vtanh.pop %v1126
  %v1612 = vtanh.pop %v1155
  %v1613 = vtanh.pop %v1184
  %v1614 = vtanh.pop %v1213
  %v1615 = vtanh.pop %v1242
  %v1616 = vtanh.pop %v1271
  %v1617 = vtanh.pop %v1300
  %v1618 = vtanh.pop %v1329
  %v1619 = vtanh.pop %v1358
  %v1620 = vtanh.pop %v1387
  %v1621 = vtanh.pop %v1416
  %v1622 = vtanh.pop %v1445
  %v1623 = vtanh.pop %v1474
  %v1624 = vtanh.pop %v1503
  %v1625 = vtanh.pop %v1532
  %v1626 = vtanh.pop %v1561
  %1627 = vset.pattern.permute.xlu0 3
  %1628 = vperm.xlu0 %1627, %v40
  %v1629 = vpop.permute.xlu0 %1628
  %1631 = vset.pattern.permute.xlu0 3
  %1632 = vperm.xlu0 %1631, %v41
  %v1633 = vpop.permute.xlu0 %1632
  %1635 = vset.pattern.permute.xlu0 3
  %1636 = vperm.xlu0 %1635, %v42
  %v1637 = vpop.permute.xlu0 %1636
  %1639 = vset.pattern.permute.xlu0 3
  %1640 = vperm.xlu0 %1639, %v43
  %v1641 = vpop.permute.xlu0 %1640
  %v1643 = vmul.f32 %v1629, %v1563
  %v1644 = vmul.f32 %v1629, %v1564
  %v1645 = vmul.f32 %v1629, %v1565
  %v1646 = vmul.f32 %v1629, %v1566
  %v1647 = vmul.f32 %v1629, %v1567
  %v1648 = vmul.f32 %v1629, %v1568
  %v1649 = vmul.f32 %v1629, %v1569
  %v1650 = vmul.f32 %v1629, %v1570
  %v1651 = vmul.f32 %v1629, %v1571
  %v1652 = vmul.f32 %v1629, %v1572
  %v1653 = vmul.f32 %v1629, %v1573
  %v1654 = vmul.f32 %v1629, %v1574
  %v1655 = vmul.f32 %v1629, %v1575
  %v1656 = vmul.f32 %v1629, %v1576
  %v1657 = vmul.f32 %v1629, %v1577
  %v1658 = vmul.f32 %v1629, %v1578
  %v1659 = vmul.f32 %v1633, %v1579
  %v1660 = vmul.f32 %v1633, %v1580
  %v1661 = vmul.f32 %v1633, %v1581
  %v1662 = vmul.f32 %v1633, %v1582
  %v1663 = vmul.f32 %v1633, %v1583
  %v1664 = vmul.f32 %v1633, %v1584
  %v1665 = vmul.f32 %v1633, %v1585
  %v1666 = vmul.f32 %v1633, %v1586
  %v1667 = vmul.f32 %v1633, %v1587
  %v1668 = vmul.f32 %v1633, %v1588
  %v1669 = vmul.f32 %v1633, %v1589
  %v1670 = vmul.f32 %v1633, %v1590
  %v1671 = vmul.f32 %v1633, %v1591
  %v1672 = vmul.f32 %v1633, %v1592
  %v1673 = vmul.f32 %v1633, %v1593
  %v1674 = vmul.f32 %v1633, %v1594
  %v1675 = vmul.f32 %v1637, %v1595
  %v1676 = vmul.f32 %v1637, %v1596
  %v1677 = vmul.f32 %v1637, %v1597
  %v1678 = vmul.f32 %v1637, %v1598
  %v1679 = vmul.f32 %v1637, %v1599
  %v1680 = vmul.f32 %v1637, %v1600
  %v1681 = vmul.f32 %v1637, %v1601
  %v1682 = vmul.f32 %v1637, %v1602
  %v1683 = vmul.f32 %v1637, %v1603
  %v1684 = vmul.f32 %v1637, %v1604
  %v1685 = vmul.f32 %v1637, %v1605
  %v1686 = vmul.f32 %v1637, %v1606
  %v1687 = vmul.f32 %v1637, %v1607
  %v1688 = vmul.f32 %v1637, %v1608
  %v1689 = vmul.f32 %v1637, %v1609
  %v1690 = vmul.f32 %v1637, %v1610
  %v1691 = vmul.f32 %v1641, %v1611
  %v1692 = vmul.f32 %v1641, %v1612
  %v1693 = vmul.f32 %v1641, %v1613
  %v1694 = vmul.f32 %v1641, %v1614
  %v1695 = vmul.f32 %v1641, %v1615
  %v1696 = vmul.f32 %v1641, %v1616
  %v1697 = vmul.f32 %v1641, %v1617
  %v1698 = vmul.f32 %v1641, %v1618
  %v1699 = vmul.f32 %v1641, %v1619
  %v1700 = vmul.f32 %v1641, %v1620
  %v1701 = vmul.f32 %v1641, %v1621
  %v1702 = vmul.f32 %v1641, %v1622
  %v1703 = vmul.f32 %v1641, %v1623
  %v1704 = vmul.f32 %v1641, %v1624
  %v1705 = vmul.f32 %v1641, %v1625
  %v1706 = vmul.f32 %v1641, %v1626
  %v1707 = vadd.f32 %v1643, %v1659
  %v1708 = vadd.f32 %v1707, %v1675
  %v1709 = vadd.f32 %v1708, %v1691
  %v1710 = vrot.slane %v1709, 4
  %v1711 = vadd.f32 %v1709, %v1710
  %v1712 = vrot.slane %v1711, 2
  %v1713 = vadd.f32 %v1711, %v1712
  %v1714 = vrot.slane %v1713, 1
  %v1715 = vadd.f32 %v1713, %v1714
  %v1716 = vadd.f32 %v1644, %v1660
  %v1717 = vadd.f32 %v1716, %v1676
  %v1718 = vadd.f32 %v1717, %v1692
  %v1719 = vrot.slane %v1718, 4
  %v1720 = vadd.f32 %v1718, %v1719
  %v1721 = vrot.slane %v1720, 2
  %v1722 = vadd.f32 %v1720, %v1721
  %v1723 = vrot.slane %v1722, 1
  %v1724 = vadd.f32 %v1722, %v1723
  %v1725 = vadd.f32 %v1645, %v1661
  %v1726 = vadd.f32 %v1725, %v1677
  %v1727 = vadd.f32 %v1726, %v1693
  %v1728 = vrot.slane %v1727, 4
  %v1729 = vadd.f32 %v1727, %v1728
  %v1730 = vrot.slane %v1729, 2
  %v1731 = vadd.f32 %v1729, %v1730
  %v1732 = vrot.slane %v1731, 1
  %v1733 = vadd.f32 %v1731, %v1732
  %v1734 = vadd.f32 %v1646, %v1662
  %v1735 = vadd.f32 %v1734, %v1678
  %v1736 = vadd.f32 %v1735, %v1694
  %v1737 = vrot.slane %v1736, 4
  %v1738 = vadd.f32 %v1736, %v1737
  %v1739 = vrot.slane %v1738, 2
  %v1740 = vadd.f32 %v1738, %v1739
  %v1741 = vrot.slane %v1740, 1
  %v1742 = vadd.f32 %v1740, %v1741
  %v1743 = vadd.f32 %v1647, %v1663
  %v1744 = vadd.f32 %v1743, %v1679
  %v1745 = vadd.f32 %v1744, %v1695
  %v1746 = vrot.slane %v1745, 4
  %v1747 = vadd.f32 %v1745, %v1746
  %v1748 = vrot.slane %v1747, 2
  %v1749 = vadd.f32 %v1747, %v1748
  %v1750 = vrot.slane %v1749, 1
  %v1751 = vadd.f32 %v1749, %v1750
  %v1752 = vadd.f32 %v1648, %v1664
  %v1753 = vadd.f32 %v1752, %v1680
  %v1754 = vadd.f32 %v1753, %v1696
  %v1755 = vrot.slane %v1754, 4
  %v1756 = vadd.f32 %v1754, %v1755
  %v1757 = vrot.slane %v1756, 2
  %v1758 = vadd.f32 %v1756, %v1757
  %v1759 = vrot.slane %v1758, 1
  %v1760 = vadd.f32 %v1758, %v1759
  %v1761 = vadd.f32 %v1649, %v1665
  %v1762 = vadd.f32 %v1761, %v1681
  %v1763 = vadd.f32 %v1762, %v1697
  %v1764 = vrot.slane %v1763, 4
  %v1765 = vadd.f32 %v1763, %v1764
  %v1766 = vrot.slane %v1765, 2
  %v1767 = vadd.f32 %v1765, %v1766
  %v1768 = vrot.slane %v1767, 1
  %v1769 = vadd.f32 %v1767, %v1768
  %v1770 = vadd.f32 %v1650, %v1666
  %v1771 = vadd.f32 %v1770, %v1682
  %v1772 = vadd.f32 %v1771, %v1698
  %v1773 = vrot.slane %v1772, 4
  %v1774 = vadd.f32 %v1772, %v1773
  %v1775 = vrot.slane %v1774, 2
  %v1776 = vadd.f32 %v1774, %v1775
  %v1777 = vrot.slane %v1776, 1
  %v1778 = vadd.f32 %v1776, %v1777
  %v1779 = vadd.f32 %v1651, %v1667
  %v1780 = vadd.f32 %v1779, %v1683
  %v1781 = vadd.f32 %v1780, %v1699
  %v1782 = vrot.slane %v1781, 4
  %v1783 = vadd.f32 %v1781, %v1782
  %v1784 = vrot.slane %v1783, 2
  %v1785 = vadd.f32 %v1783, %v1784
  %v1786 = vrot.slane %v1785, 1
  %v1787 = vadd.f32 %v1785, %v1786
  %v1788 = vadd.f32 %v1652, %v1668
  %v1789 = vadd.f32 %v1788, %v1684
  %v1790 = vadd.f32 %v1789, %v1700
  %v1791 = vrot.slane %v1790, 4
  %v1792 = vadd.f32 %v1790, %v1791
  %v1793 = vrot.slane %v1792, 2
  %v1794 = vadd.f32 %v1792, %v1793
  %v1795 = vrot.slane %v1794, 1
  %v1796 = vadd.f32 %v1794, %v1795
  %v1797 = vadd.f32 %v1653, %v1669
  %v1798 = vadd.f32 %v1797, %v1685
  %v1799 = vadd.f32 %v1798, %v1701
  %v1800 = vrot.slane %v1799, 4
  %v1801 = vadd.f32 %v1799, %v1800
  %v1802 = vrot.slane %v1801, 2
  %v1803 = vadd.f32 %v1801, %v1802
  %v1804 = vrot.slane %v1803, 1
  %v1805 = vadd.f32 %v1803, %v1804
  %v1806 = vadd.f32 %v1654, %v1670
  %v1807 = vadd.f32 %v1806, %v1686
  %v1808 = vadd.f32 %v1807, %v1702
  %v1809 = vrot.slane %v1808, 4
  %v1810 = vadd.f32 %v1808, %v1809
  %v1811 = vrot.slane %v1810, 2
  %v1812 = vadd.f32 %v1810, %v1811
  %v1813 = vrot.slane %v1812, 1
  %v1814 = vadd.f32 %v1812, %v1813
  %v1815 = vadd.f32 %v1655, %v1671
  %v1816 = vadd.f32 %v1815, %v1687
  %v1817 = vadd.f32 %v1816, %v1703
  %v1818 = vrot.slane %v1817, 4
  %v1819 = vadd.f32 %v1817, %v1818
  %v1820 = vrot.slane %v1819, 2
  %v1821 = vadd.f32 %v1819, %v1820
  %v1822 = vrot.slane %v1821, 1
  %v1823 = vadd.f32 %v1821, %v1822
  %v1824 = vadd.f32 %v1656, %v1672
  %v1825 = vadd.f32 %v1824, %v1688
  %v1826 = vadd.f32 %v1825, %v1704
  %v1827 = vrot.slane %v1826, 4
  %v1828 = vadd.f32 %v1826, %v1827
  %v1829 = vrot.slane %v1828, 2
  %v1830 = vadd.f32 %v1828, %v1829
  %v1831 = vrot.slane %v1830, 1
  %v1832 = vadd.f32 %v1830, %v1831
  %v1833 = vadd.f32 %v1657, %v1673
  %v1834 = vadd.f32 %v1833, %v1689
  %v1835 = vadd.f32 %v1834, %v1705
  %v1836 = vrot.slane %v1835, 4
  %v1837 = vadd.f32 %v1835, %v1836
  %v1838 = vrot.slane %v1837, 2
  %v1839 = vadd.f32 %v1837, %v1838
  %v1840 = vrot.slane %v1839, 1
  %v1841 = vadd.f32 %v1839, %v1840
  %v1842 = vadd.f32 %v1658, %v1674
  %v1843 = vadd.f32 %v1842, %v1690
  %v1844 = vadd.f32 %v1843, %v1706
  %v1845 = vrot.slane %v1844, 4
  %v1846 = vadd.f32 %v1844, %v1845
  %v1847 = vrot.slane %v1846, 2
  %v1848 = vadd.f32 %v1846, %v1847
  %v1849 = vrot.slane %v1848, 1
  %v1850 = vadd.f32 %v1848, %v1849
  %1851 = vst [vmem:[#allocation2] sm:$0x1] %v1715
  %1852 = vst [vmem:[#allocation2 + $0x1] sm:$0x1] %v1724
  %1853 = vst [vmem:[#allocation2 + $0x2] sm:$0x1] %v1733
  %1854 = vst [vmem:[#allocation2 + $0x3] sm:$0x1] %v1742
  %1855 = vst [vmem:[#allocation2 + $0x4] sm:$0x1] %v1751
  %1856 = vst [vmem:[#allocation2 + $0x5] sm:$0x1] %v1760
  %1857 = vst [vmem:[#allocation2 + $0x6] sm:$0x1] %v1769
  %1858 = vst [vmem:[#allocation2 + $0x7] sm:$0x1] %v1778
  %1859 = vst [vmem:[#allocation2 + $0x8] sm:$0x1] %v1787
  %1860 = vst [vmem:[#allocation2 + $0x9] sm:$0x1] %v1796
  %1861 = vst [vmem:[#allocation2 + $0xa] sm:$0x1] %v1805
  %1862 = vst [vmem:[#allocation2 + $0xb] sm:$0x1] %v1814
  %1863 = vst [vmem:[#allocation2 + $0xc] sm:$0x1] %v1823
  %1864 = vst [vmem:[#allocation2 + $0xd] sm:$0x1] %v1832
  %1865 = vst [vmem:[#allocation2 + $0xe] sm:$0x1] %v1841
  %1866 = vst [vmem:[#allocation2 + $0xf] sm:$0x1] %v1850
  %v1867 = vld [vmem:[%s5] sm:$0xff]
  %v1868 = vld [vmem:[%s5 + $0x8] sm:$0xff]
  %v1869 = vld [vmem:[%s5 + $0x10] sm:$0xff]
  %v1870 = vld [vmem:[%s5 + $0x18] sm:$0xff]
  %v1871 = vld [vmem:[#allocation2] sm:$0xff]
  %v1872 = vld [vmem:[#allocation2 + $0x8] sm:$0xff]
  %v1873 = vld [vmem:[%s6] sm:$0xff]
  %v1874 = vld [vmem:[%s6 + $0x8] sm:$0xff]
  %v1875 = vld [vmem:[%s6 + $0x10] sm:$0xff]
  %v1876 = vld [vmem:[%s6 + $0x18] sm:$0xff]
  %1878 = vset.pattern.permute.xlu0 0
  %1879 = vperm.xlu0 %1878, %v1873
  %v1880 = vpop.permute.xlu0 %1879
  %1883 = vset.pattern.permute.xlu0 0
  %1884 = vperm.xlu0 %1883, %v1874
  %v1885 = vpop.permute.xlu0 %1884
  %1888 = vset.pattern.permute.xlu0 0
  %1889 = vperm.xlu0 %1888, %v1875
  %v1890 = vpop.permute.xlu0 %1889
  %1893 = vset.pattern.permute.xlu0 0
  %1894 = vperm.xlu0 %1893, %v1876
  %v1895 = vpop.permute.xlu0 %1894
  %vm1897 = vcmask 130048
  %v1899 = vsel %vm1897, %v1867, 0
  %v1902 = vsel %vm1897, %v1868, 0
  %v1905 = vsel %vm1897, %v1869, 0
  %v1908 = vsel %vm1897, %v1870, 0
  %1910 = vmatpush.msra.mxu0 0.0
  %1911 = vmatpush.msra.mxu0 0.0
  %1912 = vmatpush.msra.mxu0 0.0
  %1913 = vmatpush.msra.mxu0 0.0
  %1914 = vmatpush.msra.mxu0 0.0
  %1915 = vmatpush.msra.mxu0 0.0
  %1916 = vmatpush.msra.mxu0 0.0
  %1917 = vmatpush.msra.mxu0 0.0
  %1918 = vmatpush.msra.mxu0 0.0
  %1919 = vmatpush.msra.mxu0 0.0
  %1920 = vmatpush.msra.mxu0 0.0
  %1921 = vmatpush.msra.mxu0 0.0
  %1922 = vmatpush.msra.mxu0 0.0
  %1923 = vmatpush.msra.mxu0 0.0
  %1924 = vmatpush.msra.mxu0 %v1872
  %1925 = vmatpush.msra.mxu0 %v1871
  %1926 = vmatmul.f32.gmra.mxu0 %v1899
  %v1927 = vpop.f32.mrf.mxu0
  %v1928 = vadd.f32 %v1880, %v1927
  %1929 = vmatmul.f32.gmra.mxu0 %v1902
  %v1930 = vpop.f32.mrf.mxu0
  %v1931 = vadd.f32 %v1885, %v1930
  %1932 = vmatmul.f32.gmra.mxu0 %v1905
  %v1933 = vpop.f32.mrf.mxu0
  %v1934 = vadd.f32 %v1890, %v1933
  %1935 = vmatmul.f32.gmra.mxu0 %v1908
  %v1936 = vpop.f32.mrf.mxu0
  %v1937 = vadd.f32 %v1895, %v1936
  %1938 = vdwg.mxu0
  %v1939 = vtanh.pop %v1928
  %v1940 = vtanh.pop %v1931
  %v1941 = vtanh.pop %v1934
  %v1942 = vtanh.pop %v1937
  %s1943 = scalar_lea.vmem %s3, 64
  %v1944 = vld [vmem:[%s1943] sm:$0xff]
  %v1945 = vld [vmem:[%s1943 + $0x8] sm:$0xff]
  %v1946 = vld [vmem:[%s1943 + $0x10] sm:$0xff]
  %v1947 = vld [vmem:[%s1943 + $0x18] sm:$0xff]
  %s1948 = scalar_lea.vmem %s4, 64
  %v1949 = vld [vmem:[%s1948] sm:$0xff]
  %v1950 = vld [vmem:[%s1948 + $0x8] sm:$0xff]
  %v1951 = vld [vmem:[%s1948 + $0x10] sm:$0xff]
  %v1952 = vld [vmem:[%s1948 + $0x18] sm:$0xff]
  %1954 = vset.pattern.permute.xlu0 0
  %1955 = vperm.xlu0 %1954, %v1949
  %v1956 = vpop.permute.xlu0 %1955
  %1959 = vset.pattern.permute.xlu0 0
  %1960 = vperm.xlu0 %1959, %v1950
  %v1961 = vpop.permute.xlu0 %1960
  %1964 = vset.pattern.permute.xlu0 0
  %1965 = vperm.xlu0 %1964, %v1951
  %v1966 = vpop.permute.xlu0 %1965
  %1969 = vset.pattern.permute.xlu0 0
  %1970 = vperm.xlu0 %1969, %v1952
  %v1971 = vpop.permute.xlu0 %1970
  %v1974 = vsel %vm516, %v1944, 0
  %v1977 = vsel %vm516, %v1945, 0
  %v1980 = vsel %vm516, %v1946, 0
  %v1983 = vsel %vm516, %v1947, 0
  %1985 = vmatpush.msra.mxu0 0.0
  %1986 = vmatpush.msra.mxu0 0.0
  %1987 = vmatpush.msra.mxu0 0.0
  %1988 = vmatpush.msra.mxu0 0.0
  %1989 = vmatpush.msra.mxu0 0.0
  %1990 = vmatpush.msra.mxu0 0.0
  %1991 = vmatpush.msra.mxu0 0.0
  %1992 = vmatpush.msra.mxu0 0.0
  %1993 = vmatpush.msra.mxu0 0.0
  %1994 = vmatpush.msra.mxu0 0.0
  %1995 = vmatpush.msra.mxu0 0.0
  %1996 = vmatpush.msra.mxu0 0.0
  %1997 = vmatpush.msra.mxu0 %v1942
  %1998 = vmatpush.msra.mxu0 %v1941
  %1999 = vmatpush.msra.mxu0 %v1940
  %2000 = vmatpush.msra.mxu0 %v1939
  %2001 = vmatmul.f32.gmra.mxu0 %v1974
  %v2002 = vpop.f32.mrf.mxu0
  %v2003 = vadd.f32 %v1956, %v2002
  %2004 = vmatmul.f32.gmra.mxu0 %v1977
  %v2005 = vpop.f32.mrf.mxu0
  %v2006 = vadd.f32 %v1961, %v2005
  %2007 = vmatmul.f32.gmra.mxu0 %v1980
  %v2008 = vpop.f32.mrf.mxu0
  %v2009 = vadd.f32 %v1966, %v2008
  %2010 = vmatmul.f32.gmra.mxu0 %v1983
  %v2011 = vpop.f32.mrf.mxu0
  %v2012 = vadd.f32 %v1971, %v2011
  %2013 = vdwg.mxu0
  %v2014 = vtanh.pop %v2003
  %v2015 = vtanh.pop %v2006
  %v2016 = vtanh.pop %v2009
  %v2017 = vtanh.pop %v2012
  %s2018 = scalar_lea.vmem %s3, 96
  %v2019 = vld [vmem:[%s2018] sm:$0xff]
  %v2020 = vld [vmem:[%s2018 + $0x8] sm:$0xff]
  %v2021 = vld [vmem:[%s2018 + $0x10] sm:$0xff]
  %v2022 = vld [vmem:[%s2018 + $0x18] sm:$0xff]
  %s2023 = scalar_lea.vmem %s4, 96
  %v2024 = vld [vmem:[%s2023] sm:$0xff]
  %v2025 = vld [vmem:[%s2023 + $0x8] sm:$0xff]
  %v2026 = vld [vmem:[%s2023 + $0x10] sm:$0xff]
  %v2027 = vld [vmem:[%s2023 + $0x18] sm:$0xff]
  %2029 = vset.pattern.permute.xlu0 0
  %2030 = vperm.xlu0 %2029, %v2024
  %v2031 = vpop.permute.xlu0 %2030
  %2034 = vset.pattern.permute.xlu0 0
  %2035 = vperm.xlu0 %2034, %v2025
  %v2036 = vpop.permute.xlu0 %2035
  %2039 = vset.pattern.permute.xlu0 0
  %2040 = vperm.xlu0 %2039, %v2026
  %v2041 = vpop.permute.xlu0 %2040
  %2044 = vset.pattern.permute.xlu0 0
  %2045 = vperm.xlu0 %2044, %v2027
  %v2046 = vpop.permute.xlu0 %2045
  %v2049 = vsel %vm516, %v2019, 0
  %v2052 = vsel %vm516, %v2020, 0
  %v2055 = vsel %vm516, %v2021, 0
  %v2058 = vsel %vm516, %v2022, 0
  %2060 = vmatpush.msra.mxu0 0.0
  %2061 = vmatpush.msra.mxu0 0.0
  %2062 = vmatpush.msra.mxu0 0.0
  %2063 = vmatpush.msra.mxu0 0.0
  %2064 = vmatpush.msra.mxu0 0.0
  %2065 = vmatpush.msra.mxu0 0.0
  %2066 = vmatpush.msra.mxu0 0.0
  %2067 = vmatpush.msra.mxu0 0.0
  %2068 = vmatpush.msra.mxu0 0.0
  %2069 = vmatpush.msra.mxu0 0.0
  %2070 = vmatpush.msra.mxu0 0.0
  %2071 = vmatpush.msra.mxu0 0.0
  %2072 = vmatpush.msra.mxu0 %v2017
  %2073 = vmatpush.msra.mxu0 %v2016
  %2074 = vmatpush.msra.mxu0 %v2015
  %2075 = vmatpush.msra.mxu0 %v2014
  %2076 = vmatmul.f32.gmra.mxu0 %v2049
  %v2077 = vpop.f32.mrf.mxu0
  %v2078 = vadd.f32 %v2031, %v2077
  %2079 = vmatmul.f32.gmra.mxu0 %v2052
  %v2080 = vpop.f32.mrf.mxu0
  %v2081 = vadd.f32 %v2036, %v2080
  %2082 = vmatmul.f32.gmra.mxu0 %v2055
  %v2083 = vpop.f32.mrf.mxu0
  %v2084 = vadd.f32 %v2041, %v2083
  %2085 = vmatmul.f32.gmra.mxu0 %v2058
  %v2086 = vpop.f32.mrf.mxu0
  %v2087 = vadd.f32 %v2046, %v2086
  %2088 = vdwg.mxu0
  %v2089 = vtanh.pop %v2078
  %v2090 = vtanh.pop %v2081
  %v2091 = vtanh.pop %v2084
  %v2092 = vtanh.pop %v2087
  %s2093 = scalar_lea.vmem %s3, 128
  %v2094 = vld [vmem:[%s2093] sm:$0xff]
  %v2095 = vld [vmem:[%s2093 + $0x8] sm:$0xff]
  %v2096 = vld [vmem:[%s2093 + $0x10] sm:$0xff]
  %v2097 = vld [vmem:[%s2093 + $0x18] sm:$0xff]
  %s2098 = scalar_lea.vmem %s4, 128
  %v2099 = vld [vmem:[%s2098] sm:$0xff]
  %v2100 = vld [vmem:[%s2098 + $0x8] sm:$0xff]
  %v2101 = vld [vmem:[%s2098 + $0x10] sm:$0xff]
  %v2102 = vld [vmem:[%s2098 + $0x18] sm:$0xff]
  %2104 = vset.pattern.permute.xlu0 0
  %2105 = vperm.xlu0 %2104, %v2099
  %v2106 = vpop.permute.xlu0 %2105
  %2109 = vset.pattern.permute.xlu0 0
  %2110 = vperm.xlu0 %2109, %v2100
  %v2111 = vpop.permute.xlu0 %2110
  %2114 = vset.pattern.permute.xlu0 0
  %2115 = vperm.xlu0 %2114, %v2101
  %v2116 = vpop.permute.xlu0 %2115
  %2119 = vset.pattern.permute.xlu0 0
  %2120 = vperm.xlu0 %2119, %v2102
  %v2121 = vpop.permute.xlu0 %2120
  %v2124 = vsel %vm516, %v2094, 0
  %v2127 = vsel %vm516, %v2095, 0
  %v2130 = vsel %vm516, %v2096, 0
  %v2133 = vsel %vm516, %v2097, 0
  %2135 = vmatpush.msra.mxu0 0.0
  %2136 = vmatpush.msra.mxu0 0.0
  %2137 = vmatpush.msra.mxu0 0.0
  %2138 = vmatpush.msra.mxu0 0.0
  %2139 = vmatpush.msra.mxu0 0.0
  %2140 = vmatpush.msra.mxu0 0.0
  %2141 = vmatpush.msra.mxu0 0.0
  %2142 = vmatpush.msra.mxu0 0.0
  %2143 = vmatpush.msra.mxu0 0.0
  %2144 = vmatpush.msra.mxu0 0.0
  %2145 = vmatpush.msra.mxu0 0.0
  %2146 = vmatpush.msra.mxu0 0.0
  %2147 = vmatpush.msra.mxu0 %v2092
  %2148 = vmatpush.msra.mxu0 %v2091
  %2149 = vmatpush.msra.mxu0 %v2090
  %2150 = vmatpush.msra.mxu0 %v2089
  %2151 = vmatmul.f32.gmra.mxu0 %v2124
  %v2152 = vpop.f32.mrf.mxu0
  %v2153 = vadd.f32 %v2106, %v2152
  %2154 = vmatmul.f32.gmra.mxu0 %v2127
  %v2155 = vpop.f32.mrf.mxu0
  %v2156 = vadd.f32 %v2111, %v2155
  %2157 = vmatmul.f32.gmra.mxu0 %v2130
  %v2158 = vpop.f32.mrf.mxu0
  %v2159 = vadd.f32 %v2116, %v2158
  %2160 = vmatmul.f32.gmra.mxu0 %v2133
  %v2161 = vpop.f32.mrf.mxu0
  %v2162 = vadd.f32 %v2121, %v2161
  %2163 = vdwg.mxu0
  %v2164 = vtanh.pop %v2153
  %v2165 = vtanh.pop %v2156
  %v2166 = vtanh.pop %v2159
  %v2167 = vtanh.pop %v2162
  %s2168 = scalar_lea.vmem %s3, 160
  %v2169 = vld [vmem:[%s2168] sm:$0xff]
  %v2170 = vld [vmem:[%s2168 + $0x8] sm:$0xff]
  %v2171 = vld [vmem:[%s2168 + $0x10] sm:$0xff]
  %v2172 = vld [vmem:[%s2168 + $0x18] sm:$0xff]
  %s2173 = scalar_lea.vmem %s4, 160
  %v2174 = vld [vmem:[%s2173] sm:$0xff]
  %v2175 = vld [vmem:[%s2173 + $0x8] sm:$0xff]
  %v2176 = vld [vmem:[%s2173 + $0x10] sm:$0xff]
  %v2177 = vld [vmem:[%s2173 + $0x18] sm:$0xff]
  %2179 = vset.pattern.permute.xlu0 0
  %2180 = vperm.xlu0 %2179, %v2174
  %v2181 = vpop.permute.xlu0 %2180
  %2184 = vset.pattern.permute.xlu0 0
  %2185 = vperm.xlu0 %2184, %v2175
  %v2186 = vpop.permute.xlu0 %2185
  %2189 = vset.pattern.permute.xlu0 0
  %2190 = vperm.xlu0 %2189, %v2176
  %v2191 = vpop.permute.xlu0 %2190
  %2194 = vset.pattern.permute.xlu0 0
  %2195 = vperm.xlu0 %2194, %v2177
  %v2196 = vpop.permute.xlu0 %2195
  %v2199 = vsel %vm516, %v2169, 0
  %v2202 = vsel %vm516, %v2170, 0
  %v2205 = vsel %vm516, %v2171, 0
  %v2208 = vsel %vm516, %v2172, 0
  %2210 = vmatpush.msra.mxu0 0.0
  %2211 = vmatpush.msra.mxu0 0.0
  %2212 = vmatpush.msra.mxu0 0.0
  %2213 = vmatpush.msra.mxu0 0.0
  %2214 = vmatpush.msra.mxu0 0.0
  %2215 = vmatpush.msra.mxu0 0.0
  %2216 = vmatpush.msra.mxu0 0.0
  %2217 = vmatpush.msra.mxu0 0.0
  %2218 = vmatpush.msra.mxu0 0.0
  %2219 = vmatpush.msra.mxu0 0.0
  %2220 = vmatpush.msra.mxu0 0.0
  %2221 = vmatpush.msra.mxu0 0.0
  %2222 = vmatpush.msra.mxu0 %v2167
  %2223 = vmatpush.msra.mxu0 %v2166
  %2224 = vmatpush.msra.mxu0 %v2165
  %2225 = vmatpush.msra.mxu0 %v2164
  %2226 = vmatmul.f32.gmra.mxu0 %v2199
  %v2227 = vpop.f32.mrf.mxu0
  %v2228 = vadd.f32 %v2181, %v2227
  %2229 = vmatmul.f32.gmra.mxu0 %v2202
  %v2230 = vpop.f32.mrf.mxu0
  %v2231 = vadd.f32 %v2186, %v2230
  %2232 = vmatmul.f32.gmra.mxu0 %v2205
  %v2233 = vpop.f32.mrf.mxu0
  %v2234 = vadd.f32 %v2191, %v2233
  %2235 = vmatmul.f32.gmra.mxu0 %v2208
  %v2236 = vpop.f32.mrf.mxu0
  %v2237 = vadd.f32 %v2196, %v2236
  %2238 = vdwg.mxu0
  %v2239 = vtanh.pop %v2228
  %v2240 = vtanh.pop %v2231
  %v2241 = vtanh.pop %v2234
  %v2242 = vtanh.pop %v2237
  %s2243 = scalar_lea.vmem %s3, 192
  %v2244 = vld [vmem:[%s2243] sm:$0xff]
  %v2245 = vld [vmem:[%s2243 + $0x8] sm:$0xff]
  %v2246 = vld [vmem:[%s2243 + $0x10] sm:$0xff]
  %v2247 = vld [vmem:[%s2243 + $0x18] sm:$0xff]
  %s2248 = scalar_lea.vmem %s4, 192
  %v2249 = vld [vmem:[%s2248] sm:$0xff]
  %v2250 = vld [vmem:[%s2248 + $0x8] sm:$0xff]
  %v2251 = vld [vmem:[%s2248 + $0x10] sm:$0xff]
  %v2252 = vld [vmem:[%s2248 + $0x18] sm:$0xff]
  %2254 = vset.pattern.permute.xlu0 0
  %2255 = vperm.xlu0 %2254, %v2249
  %v2256 = vpop.permute.xlu0 %2255
  %2259 = vset.pattern.permute.xlu0 0
  %2260 = vperm.xlu0 %2259, %v2250
  %v2261 = vpop.permute.xlu0 %2260
  %2264 = vset.pattern.permute.xlu0 0
  %2265 = vperm.xlu0 %2264, %v2251
  %v2266 = vpop.permute.xlu0 %2265
  %2269 = vset.pattern.permute.xlu0 0
  %2270 = vperm.xlu0 %2269, %v2252
  %v2271 = vpop.permute.xlu0 %2270
  %v2274 = vsel %vm516, %v2244, 0
  %v2277 = vsel %vm516, %v2245, 0
  %v2280 = vsel %vm516, %v2246, 0
  %v2283 = vsel %vm516, %v2247, 0
  %2285 = vmatpush.msra.mxu0 0.0
  %2286 = vmatpush.msra.mxu0 0.0
  %2287 = vmatpush.msra.mxu0 0.0
  %2288 = vmatpush.msra.mxu0 0.0
  %2289 = vmatpush.msra.mxu0 0.0
  %2290 = vmatpush.msra.mxu0 0.0
  %2291 = vmatpush.msra.mxu0 0.0
  %2292 = vmatpush.msra.mxu0 0.0
  %2293 = vmatpush.msra.mxu0 0.0
  %2294 = vmatpush.msra.mxu0 0.0
  %2295 = vmatpush.msra.mxu0 0.0
  %2296 = vmatpush.msra.mxu0 0.0
  %2297 = vmatpush.msra.mxu0 %v2242
  %2298 = vmatpush.msra.mxu0 %v2241
  %2299 = vmatpush.msra.mxu0 %v2240
  %2300 = vmatpush.msra.mxu0 %v2239
  %2301 = vmatmul.f32.gmra.mxu0 %v2274
  %v2302 = vpop.f32.mrf.mxu0
  %v2303 = vadd.f32 %v2256, %v2302
  %2304 = vmatmul.f32.gmra.mxu0 %v2277
  %v2305 = vpop.f32.mrf.mxu0
  %v2306 = vadd.f32 %v2261, %v2305
  %2307 = vmatmul.f32.gmra.mxu0 %v2280
  %v2308 = vpop.f32.mrf.mxu0
  %v2309 = vadd.f32 %v2266, %v2308
  %2310 = vmatmul.f32.gmra.mxu0 %v2283
  %v2311 = vpop.f32.mrf.mxu0
  %v2312 = vadd.f32 %v2271, %v2311
  %2313 = vdwg.mxu0
  %v2314 = vtanh.pop %v2303
  %v2315 = vtanh.pop %v2306
  %v2316 = vtanh.pop %v2309
  %v2317 = vtanh.pop %v2312
  %s2318 = scalar_lea.vmem %s3, 224
  %v2319 = vld [vmem:[%s2318] sm:$0xff]
  %v2320 = vld [vmem:[%s2318 + $0x8] sm:$0xff]
  %v2321 = vld [vmem:[%s2318 + $0x10] sm:$0xff]
  %v2322 = vld [vmem:[%s2318 + $0x18] sm:$0xff]
  %s2323 = scalar_lea.vmem %s4, 224
  %v2324 = vld [vmem:[%s2323] sm:$0xff]
  %v2325 = vld [vmem:[%s2323 + $0x8] sm:$0xff]
  %v2326 = vld [vmem:[%s2323 + $0x10] sm:$0xff]
  %v2327 = vld [vmem:[%s2323 + $0x18] sm:$0xff]
  %2329 = vset.pattern.permute.xlu0 0
  %2330 = vperm.xlu0 %2329, %v2324
  %v2331 = vpop.permute.xlu0 %2330
  %2334 = vset.pattern.permute.xlu0 0
  %2335 = vperm.xlu0 %2334, %v2325
  %v2336 = vpop.permute.xlu0 %2335
  %2339 = vset.pattern.permute.xlu0 0
  %2340 = vperm.xlu0 %2339, %v2326
  %v2341 = vpop.permute.xlu0 %2340
  %2344 = vset.pattern.permute.xlu0 0
  %2345 = vperm.xlu0 %2344, %v2327
  %v2346 = vpop.permute.xlu0 %2345
  %v2349 = vsel %vm516, %v2319, 0
  %v2352 = vsel %vm516, %v2320, 0
  %v2355 = vsel %vm516, %v2321, 0
  %v2358 = vsel %vm516, %v2322, 0
  %2360 = vmatpush.msra.mxu0 0.0
  %2361 = vmatpush.msra.mxu0 0.0
  %2362 = vmatpush.msra.mxu0 0.0
  %2363 = vmatpush.msra.mxu0 0.0
  %2364 = vmatpush.msra.mxu0 0.0
  %2365 = vmatpush.msra.mxu0 0.0
  %2366 = vmatpush.msra.mxu0 0.0
  %2367 = vmatpush.msra.mxu0 0.0
  %2368 = vmatpush.msra.mxu0 0.0
  %2369 = vmatpush.msra.mxu0 0.0
  %2370 = vmatpush.msra.mxu0 0.0
  %2371 = vmatpush.msra.mxu0 0.0
  %2372 = vmatpush.msra.mxu0 %v2317
  %2373 = vmatpush.msra.mxu0 %v2316
  %2374 = vmatpush.msra.mxu0 %v2315
  %2375 = vmatpush.msra.mxu0 %v2314
  %2376 = vmatmul.f32.gmra.mxu0 %v2349
  %v2377 = vpop.f32.mrf.mxu0
  %v2378 = vadd.f32 %v2331, %v2377
  %2379 = vmatmul.f32.gmra.mxu0 %v2352
  %v2380 = vpop.f32.mrf.mxu0
  %v2381 = vadd.f32 %v2336, %v2380
  %2382 = vmatmul.f32.gmra.mxu0 %v2355
  %v2383 = vpop.f32.mrf.mxu0
  %v2384 = vadd.f32 %v2341, %v2383
  %2385 = vmatmul.f32.gmra.mxu0 %v2358
  %v2386 = vpop.f32.mrf.mxu0
  %v2387 = vadd.f32 %v2346, %v2386
  %2388 = vdwg.mxu0
  %v2389 = vtanh.pop %v2378
  %v2390 = vtanh.pop %v2381
  %v2391 = vtanh.pop %v2384
  %v2392 = vtanh.pop %v2387
  %s2393 = scalar_lea.vmem %s3, 256
  %v2394 = vld [vmem:[%s2393] sm:$0xff]
  %v2395 = vld [vmem:[%s2393 + $0x8] sm:$0xff]
  %v2396 = vld [vmem:[%s2393 + $0x10] sm:$0xff]
  %v2397 = vld [vmem:[%s2393 + $0x18] sm:$0xff]
  %s2398 = scalar_lea.vmem %s4, 256
  %v2399 = vld [vmem:[%s2398] sm:$0xff]
  %v2400 = vld [vmem:[%s2398 + $0x8] sm:$0xff]
  %v2401 = vld [vmem:[%s2398 + $0x10] sm:$0xff]
  %v2402 = vld [vmem:[%s2398 + $0x18] sm:$0xff]
  %2404 = vset.pattern.permute.xlu0 0
  %2405 = vperm.xlu0 %2404, %v2399
  %v2406 = vpop.permute.xlu0 %2405
  %2409 = vset.pattern.permute.xlu0 0
  %2410 = vperm.xlu0 %2409, %v2400
  %v2411 = vpop.permute.xlu0 %2410
  %2414 = vset.pattern.permute.xlu0 0
  %2415 = vperm.xlu0 %2414, %v2401
  %v2416 = vpop.permute.xlu0 %2415
  %2419 = vset.pattern.permute.xlu0 0
  %2420 = vperm.xlu0 %2419, %v2402
  %v2421 = vpop.permute.xlu0 %2420
  %v2424 = vsel %vm516, %v2394, 0
  %v2427 = vsel %vm516, %v2395, 0
  %v2430 = vsel %vm516, %v2396, 0
  %v2433 = vsel %vm516, %v2397, 0
  %2435 = vmatpush.msra.mxu0 0.0
  %2436 = vmatpush.msra.mxu0 0.0
  %2437 = vmatpush.msra.mxu0 0.0
  %2438 = vmatpush.msra.mxu0 0.0
  %2439 = vmatpush.msra.mxu0 0.0
  %2440 = vmatpush.msra.mxu0 0.0
  %2441 = vmatpush.msra.mxu0 0.0
  %2442 = vmatpush.msra.mxu0 0.0
  %2443 = vmatpush.msra.mxu0 0.0
  %2444 = vmatpush.msra.mxu0 0.0
  %2445 = vmatpush.msra.mxu0 0.0
  %2446 = vmatpush.msra.mxu0 0.0
  %2447 = vmatpush.msra.mxu0 %v2392
  %2448 = vmatpush.msra.mxu0 %v2391
  %2449 = vmatpush.msra.mxu0 %v2390
  %2450 = vmatpush.msra.mxu0 %v2389
  %2451 = vmatmul.f32.gmra.mxu0 %v2424
  %v2452 = vpop.f32.mrf.mxu0
  %v2453 = vadd.f32 %v2406, %v2452
  %2454 = vmatmul.f32.gmra.mxu0 %v2427
  %v2455 = vpop.f32.mrf.mxu0
  %v2456 = vadd.f32 %v2411, %v2455
  %2457 = vmatmul.f32.gmra.mxu0 %v2430
  %v2458 = vpop.f32.mrf.mxu0
  %v2459 = vadd.f32 %v2416, %v2458
  %2460 = vmatmul.f32.gmra.mxu0 %v2433
  %v2461 = vpop.f32.mrf.mxu0
  %v2462 = vadd.f32 %v2421, %v2461
  %2463 = vdwg.mxu0
  %v2464 = vtanh.pop %v2453
  %v2465 = vtanh.pop %v2456
  %v2466 = vtanh.pop %v2459
  %v2467 = vtanh.pop %v2462
  %s2468 = scalar_lea.vmem %s3, 288
  %v2469 = vld [vmem:[%s2468] sm:$0xff]
  %v2470 = vld [vmem:[%s2468 + $0x8] sm:$0xff]
  %v2471 = vld [vmem:[%s2468 + $0x10] sm:$0xff]
  %v2472 = vld [vmem:[%s2468 + $0x18] sm:$0xff]
  %s2473 = scalar_lea.vmem %s4, 288
  %v2474 = vld [vmem:[%s2473] sm:$0xff]
  %v2475 = vld [vmem:[%s2473 + $0x8] sm:$0xff]
  %v2476 = vld [vmem:[%s2473 + $0x10] sm:$0xff]
  %v2477 = vld [vmem:[%s2473 + $0x18] sm:$0xff]
  %2479 = vset.pattern.permute.xlu0 0
  %2480 = vperm.xlu0 %2479, %v2474
  %v2481 = vpop.permute.xlu0 %2480
  %2484 = vset.pattern.permute.xlu0 0
  %2485 = vperm.xlu0 %2484, %v2475
  %v2486 = vpop.permute.xlu0 %2485
  %2489 = vset.pattern.permute.xlu0 0
  %2490 = vperm.xlu0 %2489, %v2476
  %v2491 = vpop.permute.xlu0 %2490
  %2494 = vset.pattern.permute.xlu0 0
  %2495 = vperm.xlu0 %2494, %v2477
  %v2496 = vpop.permute.xlu0 %2495
  %v2499 = vsel %vm516, %v2469, 0
  %v2502 = vsel %vm516, %v2470, 0
  %v2505 = vsel %vm516, %v2471, 0
  %v2508 = vsel %vm516, %v2472, 0
  %2510 = vmatpush.msra.mxu0 0.0
  %2511 = vmatpush.msra.mxu0 0.0
  %2512 = vmatpush.msra.mxu0 0.0
  %2513 = vmatpush.msra.mxu0 0.0
  %2514 = vmatpush.msra.mxu0 0.0
  %2515 = vmatpush.msra.mxu0 0.0
  %2516 = vmatpush.msra.mxu0 0.0
  %2517 = vmatpush.msra.mxu0 0.0
  %2518 = vmatpush.msra.mxu0 0.0
  %2519 = vmatpush.msra.mxu0 0.0
  %2520 = vmatpush.msra.mxu0 0.0
  %2521 = vmatpush.msra.mxu0 0.0
  %2522 = vmatpush.msra.mxu0 %v2467
  %2523 = vmatpush.msra.mxu0 %v2466
  %2524 = vmatpush.msra.mxu0 %v2465
  %2525 = vmatpush.msra.mxu0 %v2464
  %2526 = vmatmul.f32.gmra.mxu0 %v2499
  %v2527 = vpop.f32.mrf.mxu0
  %v2528 = vadd.f32 %v2481, %v2527
  %2529 = vmatmul.f32.gmra.mxu0 %v2502
  %v2530 = vpop.f32.mrf.mxu0
  %v2531 = vadd.f32 %v2486, %v2530
  %2532 = vmatmul.f32.gmra.mxu0 %v2505
  %v2533 = vpop.f32.mrf.mxu0
  %v2534 = vadd.f32 %v2491, %v2533
  %2535 = vmatmul.f32.gmra.mxu0 %v2508
  %v2536 = vpop.f32.mrf.mxu0
  %v2537 = vadd.f32 %v2496, %v2536
  %2538 = vdwg.mxu0
  %v2539 = vtanh.pop %v2528
  %v2540 = vtanh.pop %v2531
  %v2541 = vtanh.pop %v2534
  %v2542 = vtanh.pop %v2537
  %v2543 = vld [vmem:[%s7] sm:$0xff]
  %v2544 = vld [vmem:[%s8] sm:$0xff]
  %2546 = vset.pattern.permute.xlu0 0
  %2547 = vperm.xlu0 %2546, %v2544
  %v2548 = vpop.permute.xlu0 %2547
  %v2551 = vsel %vm516, %v2543, 0
  %2553 = vmatpush.msra.mxu0 0.0
  %2554 = vmatpush.msra.mxu0 0.0
  %2555 = vmatpush.msra.mxu0 0.0
  %2556 = vmatpush.msra.mxu0 0.0
  %2557 = vmatpush.msra.mxu0 0.0
  %2558 = vmatpush.msra.mxu0 0.0
  %2559 = vmatpush.msra.mxu0 0.0
  %2560 = vmatpush.msra.mxu0 0.0
  %2561 = vmatpush.msra.mxu0 0.0
  %2562 = vmatpush.msra.mxu0 0.0
  %2563 = vmatpush.msra.mxu0 0.0
  %2564 = vmatpush.msra.mxu0 0.0
  %2565 = vmatpush.msra.mxu0 %v2542
  %2566 = vmatpush.msra.mxu0 %v2541
  %2567 = vmatpush.msra.mxu0 %v2540
  %2568 = vmatpush.msra.mxu0 %v2539
  %2569 = vmatmul.f32.gmra.mxu0 %v2551
  %v2570 = vpop.f32.mrf.mxu0
  %v2571 = vadd.f32 %v2548, %v2570
  %2572 = vdwg.mxu0
  %2573 = vst [vmem:[%s11] sm:$0xff] %v2571
  %v2574 = vld [vmem:[%s9] sm:$0x1f]
  %v2575 = vld [vmem:[%s10] sm:$0x1f]
  %2577 = vset.pattern.permute.xlu0 0
  %2578 = vperm.xlu0 %2577, %v2575
  %v2579 = vpop.permute.xlu0 %2578
  %v2582 = vsel %vm516, %v2574, 0
  %2584 = vmatpush.msra.mxu0 0.0
  %2585 = vmatpush.msra.mxu0 0.0
  %2586 = vmatpush.msra.mxu0 0.0
  %2587 = vmatpush.msra.mxu0 0.0
  %2588 = vmatpush.msra.mxu0 0.0
  %2589 = vmatpush.msra.mxu0 0.0
  %2590 = vmatpush.msra.mxu0 0.0
  %2591 = vmatpush.msra.mxu0 0.0
  %2592 = vmatpush.msra.mxu0 0.0
  %2593 = vmatpush.msra.mxu0 0.0
  %2594 = vmatpush.msra.mxu0 0.0
  %2595 = vmatpush.msra.mxu0 0.0
  %2596 = vmatpush.msra.mxu0 %v2542
  %2597 = vmatpush.msra.mxu0 %v2541
  %2598 = vmatpush.msra.mxu0 %v2540
  %2599 = vmatpush.msra.mxu0 %v2539
  %2600 = vmatmul.f32.gmra.mxu0 %v2582
  %v2601 = vpop.f32.mrf.mxu0
  %v2602 = vadd.f32 %v2579, %v2601
  %2603 = vdwg.mxu0
  %2604 = vst [vmem:[%s12] sm:$0x1f] %v2602
  // Predicated region
  $region46: #{wpinn_forward.1} parent=0 // pred_check
    _
  $region47: #{wpinn_forward.1} parent=0 // pred_check_branch
    %2606 = sbr.rel (0) target = $region49
  $region48: #{wpinn_forward.1} parent=0 // pred_region
    _
  $region49: #{wpinn_forward.1} parent=0 // pred_fallthru
    _
  // Predicated region
  $region50: #{wpinn_forward.1} parent=0 // pred_check
    _
  $region51: #{wpinn_forward.1} parent=0 // pred_check_branch
    %2608 = sbr.rel (0) target = $region53
  $region52: #{wpinn_forward.1} parent=0 // pred_region
    _
  $region53: #{wpinn_forward.1} parent=0 // pred_fallthru
    _
  // Predicated region
  $region54: #{wpinn_forward.1} parent=0 // pred_check
    _
  $region55: #{wpinn_forward.1} parent=0 // pred_check_branch
    %2610 = sbr.rel (0) target = $region57
  $region56: #{wpinn_forward.1} parent=0 // pred_region
    _
  $region57: #{wpinn_forward.1} parent=0 // pred_fallthru
    _
  // Predicated region
  $region58: #{wpinn_forward.1} parent=0 // pred_check
    _
  $region59: #{wpinn_forward.1} parent=0 // pred_check_branch
    %2612 = sbr.rel (0) target = $region61
  $region60: #{wpinn_forward.1} parent=0 // pred_region
    _
  $region61: #{wpinn_forward.1} parent=0 // pred_fallthru
    _

</llo_original>
